<compile_context>
chip_gen: v5e
topology: v5e:2x2
jax: 0.10.0
libtpu: 0.0.40
codegen_flags: <defaults>
</compile_context>

<pallas_src>
import functools

import jax
import jax.numpy as jnp
from jax.experimental import pallas as pl
from jax.experimental.pallas import tpu as pltpu

# ----------------------------- module config ------------------------------ #
LATENT = 29
DIMS = [64, 64, 64, 64]
LATENT_IN = (2,)
NORM_LAYERS = (0, 1, 2, 3)
EPS = 1e-5

D0 = LATENT + 3                      # 32 = latent_size + 3
FULL = [D0] + DIMS + [1]             # [32, 64, 64, 64, 64, 1]
NUM_LAYERS = len(FULL)               # 6  -> layers 0..4
H1 = FULL[2] - FULL[0]               # 32 = layer-1 output width (latent_in at 2)


def _layer_out_dim(layer):
    if layer + 1 in LATENT_IN:
        return FULL[layer + 1] - FULL[0]
    return FULL[layer + 1]


# ------------------------------- kernel ----------------------------------- #
# vecs is a (64, 12) f32 array of per-feature COLUMN vectors (feature on the
# sublane axis, zero-padded to 64 rows where needed):
#   col  0: b0   1: g0   2: be0    3: b1   4: g1   5: be1
#   col  6: b2   7: g2   8: be2    9: b3  10: g3  11: be3
def decoder_kernel(x_ref, w0t, w1t, w2ht, w2xt, w3t, w4t, vecs, b4_ref, o_ref):
    x_bf = x_ref[...]                                   # (32, T) bf16

    def ln_relu(h, col, width):
        # single-pass LayerNorm over the feature (sublane) axis + ReLU -> bf16
        g = vecs[0:width, col + 1:col + 2]              # (width, 1)
        be = vecs[0:width, col + 2:col + 3]             # (width, 1)
        inv = jnp.float32(1.0 / width)
        s1 = jnp.sum(h, axis=0, keepdims=True)          # (1, T)
        s2 = jnp.sum(h * h, axis=0, keepdims=True)      # (1, T)
        mu = s1 * inv
        var = jnp.maximum(s2 * inv - mu * mu, 0.0)      # clamp f32 cancellation
        y = (h - mu) * jax.lax.rsqrt(var + EPS) * g + be
        return jnp.maximum(y, 0.0).astype(jnp.bfloat16)

    def linear(w_ref, a_bf, col, width):
        # (width, in) @ (in, T) -> (width, T) f32, + bias column
        return (jnp.dot(w_ref[...], a_bf, preferred_element_type=jnp.float32)
                + vecs[0:width, col:col + 1])

    # layer 0: Linear(32 -> 64) + LN + ReLU
    h = ln_relu(linear(w0t, x_bf, 0, 64), 0, 64)        # (64, T) bf16

    # layer 1: Linear(64 -> 32) + LN + ReLU            (out = dims[2] - dims[0])
    h = ln_relu(linear(w1t, h, 3, 32), 3, 32)           # (32, T) bf16

    # layer 2: latent_in -> W2 @ cat([h, x]) == W2h @ h + W2x @ x  (no concat)
    h2 = (jnp.dot(w2ht[...], h, preferred_element_type=jnp.float32)
          + jnp.dot(w2xt[...], x_bf, preferred_element_type=jnp.float32)
          + vecs[0:64, 6:7])
    h = ln_relu(h2, 6, 64)                              # (64, T) bf16

    # layer 3: Linear(64 -> 64) + LN + ReLU
    h = ln_relu(linear(w3t, h, 9, 64), 9, 64)           # (64, T) bf16

    # layer 4: Linear(64 -> 1) + tanh, lane-dense (1, T) output.
    # w4t is w4^T zero-padded to 8 rows; only row 0 is valid.
    r = jnp.dot(w4t[...], h, preferred_element_type=jnp.float32)   # (8, T)
    o_ref[...] = jnp.tanh(r[0:1, :] + b4_ref[0]).astype(o_ref.dtype)


# ------------------------------- wrapper ----------------------------------- #
def prepare_params(params):
    """One-time weight prep: transpose to (out, in), bf16 cast, pack LN vectors."""
    (w0, b0, g0, be0,
     w1, b1, g1, be1,
     w2, b2, g2, be2,
     w3, b3, g3, be3,
     w4, b4) = params

    bf = jnp.bfloat16
    w0t = w0.T.astype(bf)                               # (64, 32)
    w1t = w1.T.astype(bf)                               # (32, 64)
    w2ht = w2[:H1, :].T.astype(bf)                      # (64, 32)  (acts on h1)
    w2xt = w2[H1:, :].T.astype(bf)                      # (64, 32)  (acts on x)
    w3t = w3.T.astype(bf)                               # (64, 64)
    w4t = jnp.pad(w4.T.astype(bf), ((0, 7), (0, 0)))    # (8, 64), rows 1..7 zero

    def col(v):
        c = v.reshape(-1, 1).astype(jnp.float32)
        return jnp.pad(c, ((0, 64 - c.shape[0]), (0, 0)))

    vecs = jnp.concatenate(
        [col(v) for v in (b0, g0, be0, b1, g1, be1, b2, g2, be2, b3, g3, be3)],
        axis=1)                                         # (64, 12) f32

    return (w0t, w1t, w2ht, w2xt, w3t, w4t, vecs,
            b4.reshape((1,)).astype(jnp.float32))


@functools.partial(jax.jit, static_argnames=("tile_n",))
def decoder_forward(x, prepped, *, tile_n=4096):
    w0t, w1t, w2ht, w2xt, w3t, w4t, vecs, b4s = prepped
    N, d_in = x.shape
    assert d_in == D0
    assert tile_n % 128 == 0, "tile_n must be a multiple of 128 (lane-dense tiles)"

    # Keep the grid >= 2 steps whenever possible so both v7x TensorCores get work.
    half = (N + 1) // 2
    half_tile = ((half + 127) // 128) * 128
    tile_eff = max(128, min(tile_n, half_tile))

    n_pad = -(-N // tile_eff) * tile_eff

    # Feature-major bf16 input stream: (D0, n_pad).
    x_t = x.astype(jnp.bfloat16).T
    if n_pad != N:
        x_t = jnp.pad(x_t, ((0, 0), (0, n_pad - N)))

    def full(a):
        return pl.BlockSpec(a.shape, lambda i: (0, 0))

    macs_per_row = (D0 * 64 + 64 * 32 + H1 * 64 + D0 * 64 + 64 * 64 + 64)
    param_bytes = sum(int(p.size) * p.dtype.itemsize
                      for p in (w0t, w1t, w2ht, w2xt, w3t, w4t, vecs, b4s))
    cost = pl.CostEstimate(
        flops=2 * macs_per_row * n_pad,
        transcendentals=5 * n_pad,                       # 4x rsqrt + tanh per row
        bytes_accessed=n_pad * D0 * 2 + n_pad * 4 + param_bytes)

    out = pl.pallas_call(
        decoder_kernel,
        out_shape=jax.ShapeDtypeStruct((1, n_pad), jnp.float32),
        grid=(n_pad // tile_eff,),
        in_specs=[
            pl.BlockSpec((D0, tile_eff), lambda i: (0, i)),   # x tile (feature-major)
            full(w0t), full(w1t), full(w2ht), full(w2xt), full(w3t), full(w4t),
            full(vecs),
            pl.BlockSpec(memory_space=pltpu.MemorySpace.SMEM),  # scalar bias b4
        ],
        out_specs=pl.BlockSpec((1, tile_eff), lambda i: (0, i)),  # lane-dense output
        compiler_params=pltpu.CompilerParams(
            dimension_semantics=("parallel",)),
        cost_estimate=cost,
    )(x_t, w0t, w1t, w2ht, w2xt, w3t, w4t, vecs, b4s)

    return out.reshape(n_pad, 1)[:N]


# ------------------------ deterministic parameter init --------------------- #
def init_params(key):
    params = []
    for layer in range(NUM_LAYERS - 1):
        in_dim = FULL[layer]
        out_dim = _layer_out_dim(layer)
        key, kw, kb, kg, kbe = jax.random.split(key, 5)
        w = (jax.random.normal(kw, (in_dim, out_dim), jnp.float32)
             / jnp.sqrt(jnp.float32(in_dim)))
        b = 0.01 * jax.random.normal(kb, (1, out_dim), jnp.float32)
        params += [w, b]
        if layer in NORM_LAYERS and layer < NUM_LAYERS - 2:
            gamma = 1.0 + 0.1 * jax.random.normal(kg, (1, out_dim), jnp.float32)
            beta = 0.1 * jax.random.normal(kbe, (1, out_dim), jnp.float32)
            params += [gamma, beta]
    return params


# ----------------------------- pure-JAX reference -------------------------- #
def decoder_reference(x, params, matmul_dtype=jnp.float32):
    """Mirrors the PyTorch forward; matmul_dtype=bfloat16 mirrors the kernel's MXU path."""
    p = list(params)
    x_in = x
    h = x
    for layer in range(NUM_LAYERS - 1):
        if layer in LATENT_IN:
            h = jnp.concatenate([h, x_in], axis=1)
        w, b = p.pop(0), p.pop(0)
        h = jnp.dot(h.astype(matmul_dtype), w.astype(matmul_dtype),
                    preferred_element_type=jnp.float32) + b
        if layer < NUM_LAYERS - 2:
            if layer in NORM_LAYERS:
                g, be = p.pop(0), p.pop(0)
                mu = jnp.mean(h, axis=-1, keepdims=True)
                var = jnp.mean((h - mu) ** 2, axis=-1, keepdims=True)
                h = (h - mu) * jax.lax.rsqrt(var + EPS) * g + be
            h = jnp.maximum(h, 0.0)
    return jnp.tanh(h)


# ---------------------------------- main ----------------------------------- #
if __name__ == "__main__":
    key = jax.random.PRNGKey(0)
    key, kx = jax.random.split(key)

    # Small demo batch of query points (500 -> pads to 512, 2 grid steps with the
    # auto tile cap).  Production batches use tile_n up to 4096-8192.
    N = 500
    x = jax.random.normal(kx, (N, D0), jnp.float32)      # (N, latent+3) = (500, 32)

    params = init_params(key)
    prepped = prepare_params(params)

    out = decoder_forward(x, prepped)
    out = jax.block_until_ready(out)
    assert out.shape == (N, 1)

    # Strict check against a reference that uses the same bf16-input / f32-accum
    # matmuls as the kernel (verifies the kernel structure).
    ref_bf16 = decoder_reference(x, params, matmul_dtype=jnp.bfloat16)
    assert jnp.allclose(out, ref_bf16, atol=2e-3, rtol=2e-3), (
        float(jnp.max(jnp.abs(out - ref_bf16))))

    # Loose sanity check against the pure-f32 reference (bf16 MXU path costs ~1e-2).
    ref_f32 = decoder_reference(x, params, matmul_dtype=jnp.float32)
    assert jnp.allclose(out, ref_f32, atol=1e-1, rtol=1e-1), (
        float(jnp.max(jnp.abs(out - ref_f32))))

    print("KERNEL_OK")
</pallas_src>

<mosaic_0001>
module attributes {stable_mosaic.version = 11 : i64} {
  func.func @decoder_kernel(%arg0: i32, %arg1: memref<32x256xbf16, #tpu.memory_space<vmem>>, %arg2: memref<64x32xbf16, #tpu.memory_space<vmem>>, %arg3: memref<32x64xbf16, #tpu.memory_space<vmem>>, %arg4: memref<64x32xbf16, #tpu.memory_space<vmem>>, %arg5: memref<64x32xbf16, #tpu.memory_space<vmem>>, %arg6: memref<64x64xbf16, #tpu.memory_space<vmem>>, %arg7: memref<8x64xbf16, #tpu.memory_space<vmem>>, %arg8: memref<64x12xf32, #tpu.memory_space<vmem>>, %arg9: memref<1xf32, #tpu.memory_space<smem>>, %arg10: memref<1x256xf32, #tpu.memory_space<vmem>>) attributes {dimension_semantics = [#tpu.dimension_semantics<parallel>], iteration_bounds = array<i64: 2>, scalar_prefetch = 0 : i64, scratch_operands = 0 : i64, tpu.core_type = #tpu.core_type<tc>, window_params = [{transform_indices = @transform_0, window_bounds = array<i64: 32, 256>}, {pipeline_mode = #tpu.pipeline_mode<synchronous>, transform_indices = @transform_1, window_bounds = array<i64: 64, 32>}, {pipeline_mode = #tpu.pipeline_mode<synchronous>, transform_indices = @transform_2, window_bounds = array<i64: 32, 64>}, {pipeline_mode = #tpu.pipeline_mode<synchronous>, transform_indices = @transform_3, window_bounds = array<i64: 64, 32>}, {pipeline_mode = #tpu.pipeline_mode<synchronous>, transform_indices = @transform_4, window_bounds = array<i64: 64, 32>}, {pipeline_mode = #tpu.pipeline_mode<synchronous>, transform_indices = @transform_5, window_bounds = array<i64: 64, 64>}, {pipeline_mode = #tpu.pipeline_mode<synchronous>, transform_indices = @transform_6, window_bounds = array<i64: 8, 64>}, {pipeline_mode = #tpu.pipeline_mode<synchronous>, transform_indices = @transform_7, window_bounds = array<i64: 64, 12>}, {transform_indices = @transform_8, window_bounds = array<i64: 1>}, {transform_indices = @transform_9, window_bounds = array<i64: 1, 256>}]} {
    %c0 = arith.constant 0 : index
    %c0_0 = arith.constant 0 : index
    %0 = vector.load %arg1[%c0, %c0_0] : memref<32x256xbf16, #tpu.memory_space<vmem>>, vector<32x256xbf16>
    %c0_1 = arith.constant 0 : index
    %c0_2 = arith.constant 0 : index
    %1 = vector.load %arg2[%c0_1, %c0_2] : memref<64x32xbf16, #tpu.memory_space<vmem>>, vector<64x32xbf16>
    %cst = arith.constant dense<0.000000e+00> : vector<64x256xf32>
    %2 = tpu.matmul %1, %0, %cst {dimension_numbers = #tpu.dot_dimension_numbers<[1], [0], [0], [1], [0, 0, 1, 1], [], []>} : vector<64x32xbf16>, vector<32x256xbf16>, vector<64x256xf32> -> vector<64x256xf32>
    %c0_3 = arith.constant 0 : index
    %c0_4 = arith.constant 0 : index
    %3 = vector.load %arg8[%c0_3, %c0_4] : memref<64x12xf32, #tpu.memory_space<vmem>>, vector<64x1xf32>
    %4 = vector.broadcast %3 : vector<64x1xf32> to vector<64x256xf32>
    %5 = arith.addf %2, %4 : vector<64x256xf32>
    %c0_5 = arith.constant 0 : index
    %c1 = arith.constant 1 : index
    %6 = vector.load %arg8[%c0_5, %c1] : memref<64x12xf32, #tpu.memory_space<vmem>>, vector<64x1xf32>
    %c0_6 = arith.constant 0 : index
    %c2 = arith.constant 2 : index
    %7 = vector.load %arg8[%c0_6, %c2] : memref<64x12xf32, #tpu.memory_space<vmem>>, vector<64x1xf32>
    %cst_7 = arith.constant dense<0.000000e+00> : vector<256xf32>
    %8 = vector.multi_reduction <add>, %5, %cst_7 [0] : vector<64x256xf32> to vector<256xf32>
    %9 = vector.shape_cast %8 : vector<256xf32> to vector<1x256xf32>
    %10 = arith.mulf %5, %5 : vector<64x256xf32>
    %cst_8 = arith.constant dense<0.000000e+00> : vector<256xf32>
    %11 = vector.multi_reduction <add>, %10, %cst_8 [0] : vector<64x256xf32> to vector<256xf32>
    %12 = vector.shape_cast %11 : vector<256xf32> to vector<1x256xf32>
    %cst_9 = arith.constant 1.562500e-02 : f32
    %13 = vector.broadcast %cst_9 : f32 to vector<1x256xf32>
    %14 = arith.mulf %9, %13 : vector<1x256xf32>
    %cst_10 = arith.constant 1.562500e-02 : f32
    %15 = vector.broadcast %cst_10 : f32 to vector<1x256xf32>
    %16 = arith.mulf %12, %15 : vector<1x256xf32>
    %17 = arith.mulf %14, %14 : vector<1x256xf32>
    %18 = arith.subf %16, %17 : vector<1x256xf32>
    %cst_11 = arith.constant 0.000000e+00 : f32
    %19 = vector.broadcast %cst_11 : f32 to vector<1x256xf32>
    %20 = arith.maximumf %18, %19 : vector<1x256xf32>
    %21 = vector.broadcast %14 : vector<1x256xf32> to vector<64x256xf32>
    %22 = arith.subf %5, %21 : vector<64x256xf32>
    %cst_12 = arith.constant 9.99999974E-6 : f32
    %23 = vector.broadcast %cst_12 : f32 to vector<1x256xf32>
    %24 = arith.addf %20, %23 : vector<1x256xf32>
    %25 = math.rsqrt %24 : vector<1x256xf32>
    %26 = vector.broadcast %25 : vector<1x256xf32> to vector<64x256xf32>
    %27 = arith.mulf %22, %26 : vector<64x256xf32>
    %28 = vector.broadcast %6 : vector<64x1xf32> to vector<64x256xf32>
    %29 = arith.mulf %27, %28 : vector<64x256xf32>
    %30 = vector.broadcast %7 : vector<64x1xf32> to vector<64x256xf32>
    %31 = arith.addf %29, %30 : vector<64x256xf32>
    %cst_13 = arith.constant 0.000000e+00 : f32
    %32 = vector.broadcast %cst_13 : f32 to vector<64x256xf32>
    %33 = arith.maximumf %31, %32 : vector<64x256xf32>
    %34 = arith.truncf %33 : vector<64x256xf32> to vector<64x256xbf16>
    %c0_14 = arith.constant 0 : index
    %c0_15 = arith.constant 0 : index
    %35 = vector.load %arg3[%c0_14, %c0_15] : memref<32x64xbf16, #tpu.memory_space<vmem>>, vector<32x64xbf16>
    %cst_16 = arith.constant dense<0.000000e+00> : vector<32x256xf32>
    %36 = tpu.matmul %35, %34, %cst_16 {dimension_numbers = #tpu.dot_dimension_numbers<[1], [0], [0], [1], [0, 0, 1, 1], [], []>} : vector<32x64xbf16>, vector<64x256xbf16>, vector<32x256xf32> -> vector<32x256xf32>
    %c0_17 = arith.constant 0 : index
    %c3 = arith.constant 3 : index
    %37 = vector.load %arg8[%c0_17, %c3] : memref<64x12xf32, #tpu.memory_space<vmem>>, vector<32x1xf32>
    %38 = vector.broadcast %37 : vector<32x1xf32> to vector<32x256xf32>
    %39 = arith.addf %36, %38 : vector<32x256xf32>
    %c0_18 = arith.constant 0 : index
    %c4 = arith.constant 4 : index
    %40 = vector.load %arg8[%c0_18, %c4] : memref<64x12xf32, #tpu.memory_space<vmem>>, vector<32x1xf32>
    %c0_19 = arith.constant 0 : index
    %c5 = arith.constant 5 : index
    %41 = vector.load %arg8[%c0_19, %c5] : memref<64x12xf32, #tpu.memory_space<vmem>>, vector<32x1xf32>
    %cst_20 = arith.constant dense<0.000000e+00> : vector<256xf32>
    %42 = vector.multi_reduction <add>, %39, %cst_20 [0] : vector<32x256xf32> to vector<256xf32>
    %43 = vector.shape_cast %42 : vector<256xf32> to vector<1x256xf32>
    %44 = arith.mulf %39, %39 : vector<32x256xf32>
    %cst_21 = arith.constant dense<0.000000e+00> : vector<256xf32>
    %45 = vector.multi_reduction <add>, %44, %cst_21 [0] : vector<32x256xf32> to vector<256xf32>
    %46 = vector.shape_cast %45 : vector<256xf32> to vector<1x256xf32>
    %cst_22 = arith.constant 3.125000e-02 : f32
    %47 = vector.broadcast %cst_22 : f32 to vector<1x256xf32>
    %48 = arith.mulf %43, %47 : vector<1x256xf32>
    %cst_23 = arith.constant 3.125000e-02 : f32
    %49 = vector.broadcast %cst_23 : f32 to vector<1x256xf32>
    %50 = arith.mulf %46, %49 : vector<1x256xf32>
    %51 = arith.mulf %48, %48 : vector<1x256xf32>
    %52 = arith.subf %50, %51 : vector<1x256xf32>
    %cst_24 = arith.constant 0.000000e+00 : f32
    %53 = vector.broadcast %cst_24 : f32 to vector<1x256xf32>
    %54 = arith.maximumf %52, %53 : vector<1x256xf32>
    %55 = vector.broadcast %48 : vector<1x256xf32> to vector<32x256xf32>
    %56 = arith.subf %39, %55 : vector<32x256xf32>
    %cst_25 = arith.constant 9.99999974E-6 : f32
    %57 = vector.broadcast %cst_25 : f32 to vector<1x256xf32>
    %58 = arith.addf %54, %57 : vector<1x256xf32>
    %59 = math.rsqrt %58 : vector<1x256xf32>
    %60 = vector.broadcast %59 : vector<1x256xf32> to vector<32x256xf32>
    %61 = arith.mulf %56, %60 : vector<32x256xf32>
    %62 = vector.broadcast %40 : vector<32x1xf32> to vector<32x256xf32>
    %63 = arith.mulf %61, %62 : vector<32x256xf32>
    %64 = vector.broadcast %41 : vector<32x1xf32> to vector<32x256xf32>
    %65 = arith.addf %63, %64 : vector<32x256xf32>
    %cst_26 = arith.constant 0.000000e+00 : f32
    %66 = vector.broadcast %cst_26 : f32 to vector<32x256xf32>
    %67 = arith.maximumf %65, %66 : vector<32x256xf32>
    %68 = arith.truncf %67 : vector<32x256xf32> to vector<32x256xbf16>
    %c0_27 = arith.constant 0 : index
    %c0_28 = arith.constant 0 : index
    %69 = vector.load %arg4[%c0_27, %c0_28] : memref<64x32xbf16, #tpu.memory_space<vmem>>, vector<64x32xbf16>
    %cst_29 = arith.constant dense<0.000000e+00> : vector<64x256xf32>
    %70 = tpu.matmul %69, %68, %cst_29 {dimension_numbers = #tpu.dot_dimension_numbers<[1], [0], [0], [1], [0, 0, 1, 1], [], []>} : vector<64x32xbf16>, vector<32x256xbf16>, vector<64x256xf32> -> vector<64x256xf32>
    %c0_30 = arith.constant 0 : index
    %c0_31 = arith.constant 0 : index
    %71 = vector.load %arg5[%c0_30, %c0_31] : memref<64x32xbf16, #tpu.memory_space<vmem>>, vector<64x32xbf16>
    %cst_32 = arith.constant dense<0.000000e+00> : vector<64x256xf32>
    %72 = tpu.matmul %71, %0, %cst_32 {dimension_numbers = #tpu.dot_dimension_numbers<[1], [0], [0], [1], [0, 0, 1, 1], [], []>} : vector<64x32xbf16>, vector<32x256xbf16>, vector<64x256xf32> -> vector<64x256xf32>
    %73 = arith.addf %70, %72 : vector<64x256xf32>
    %c0_33 = arith.constant 0 : index
    %c6 = arith.constant 6 : index
    %74 = vector.load %arg8[%c0_33, %c6] : memref<64x12xf32, #tpu.memory_space<vmem>>, vector<64x1xf32>
    %75 = vector.broadcast %74 : vector<64x1xf32> to vector<64x256xf32>
    %76 = arith.addf %73, %75 : vector<64x256xf32>
    %c0_34 = arith.constant 0 : index
    %c7 = arith.constant 7 : index
    %77 = vector.load %arg8[%c0_34, %c7] : memref<64x12xf32, #tpu.memory_space<vmem>>, vector<64x1xf32>
    %c0_35 = arith.constant 0 : index
    %c8 = arith.constant 8 : index
    %78 = vector.load %arg8[%c0_35, %c8] : memref<64x12xf32, #tpu.memory_space<vmem>>, vector<64x1xf32>
    %cst_36 = arith.constant dense<0.000000e+00> : vector<256xf32>
    %79 = vector.multi_reduction <add>, %76, %cst_36 [0] : vector<64x256xf32> to vector<256xf32>
    %80 = vector.shape_cast %79 : vector<256xf32> to vector<1x256xf32>
    %81 = arith.mulf %76, %76 : vector<64x256xf32>
    %cst_37 = arith.constant dense<0.000000e+00> : vector<256xf32>
    %82 = vector.multi_reduction <add>, %81, %cst_37 [0] : vector<64x256xf32> to vector<256xf32>
    %83 = vector.shape_cast %82 : vector<256xf32> to vector<1x256xf32>
    %cst_38 = arith.constant 1.562500e-02 : f32
    %84 = vector.broadcast %cst_38 : f32 to vector<1x256xf32>
    %85 = arith.mulf %80, %84 : vector<1x256xf32>
    %cst_39 = arith.constant 1.562500e-02 : f32
    %86 = vector.broadcast %cst_39 : f32 to vector<1x256xf32>
    %87 = arith.mulf %83, %86 : vector<1x256xf32>
    %88 = arith.mulf %85, %85 : vector<1x256xf32>
    %89 = arith.subf %87, %88 : vector<1x256xf32>
    %cst_40 = arith.constant 0.000000e+00 : f32
    %90 = vector.broadcast %cst_40 : f32 to vector<1x256xf32>
    %91 = arith.maximumf %89, %90 : vector<1x256xf32>
    %92 = vector.broadcast %85 : vector<1x256xf32> to vector<64x256xf32>
    %93 = arith.subf %76, %92 : vector<64x256xf32>
    %cst_41 = arith.constant 9.99999974E-6 : f32
    %94 = vector.broadcast %cst_41 : f32 to vector<1x256xf32>
    %95 = arith.addf %91, %94 : vector<1x256xf32>
    %96 = math.rsqrt %95 : vector<1x256xf32>
    %97 = vector.broadcast %96 : vector<1x256xf32> to vector<64x256xf32>
    %98 = arith.mulf %93, %97 : vector<64x256xf32>
    %99 = vector.broadcast %77 : vector<64x1xf32> to vector<64x256xf32>
    %100 = arith.mulf %98, %99 : vector<64x256xf32>
    %101 = vector.broadcast %78 : vector<64x1xf32> to vector<64x256xf32>
    %102 = arith.addf %100, %101 : vector<64x256xf32>
    %cst_42 = arith.constant 0.000000e+00 : f32
    %103 = vector.broadcast %cst_42 : f32 to vector<64x256xf32>
    %104 = arith.maximumf %102, %103 : vector<64x256xf32>
    %105 = arith.truncf %104 : vector<64x256xf32> to vector<64x256xbf16>
    %c0_43 = arith.constant 0 : index
    %c0_44 = arith.constant 0 : index
    %106 = vector.load %arg6[%c0_43, %c0_44] : memref<64x64xbf16, #tpu.memory_space<vmem>>, vector<64x64xbf16>
    %cst_45 = arith.constant dense<0.000000e+00> : vector<64x256xf32>
    %107 = tpu.matmul %106, %105, %cst_45 {dimension_numbers = #tpu.dot_dimension_numbers<[1], [0], [0], [1], [0, 0, 1, 1], [], []>} : vector<64x64xbf16>, vector<64x256xbf16>, vector<64x256xf32> -> vector<64x256xf32>
    %c0_46 = arith.constant 0 : index
    %c9 = arith.constant 9 : index
    %108 = vector.load %arg8[%c0_46, %c9] : memref<64x12xf32, #tpu.memory_space<vmem>>, vector<64x1xf32>
    %109 = vector.broadcast %108 : vector<64x1xf32> to vector<64x256xf32>
    %110 = arith.addf %107, %109 : vector<64x256xf32>
    %c0_47 = arith.constant 0 : index
    %c10 = arith.constant 10 : index
    %111 = vector.load %arg8[%c0_47, %c10] : memref<64x12xf32, #tpu.memory_space<vmem>>, vector<64x1xf32>
    %c0_48 = arith.constant 0 : index
    %c11 = arith.constant 11 : index
    %112 = vector.load %arg8[%c0_48, %c11] : memref<64x12xf32, #tpu.memory_space<vmem>>, vector<64x1xf32>
    %cst_49 = arith.constant dense<0.000000e+00> : vector<256xf32>
    %113 = vector.multi_reduction <add>, %110, %cst_49 [0] : vector<64x256xf32> to vector<256xf32>
    %114 = vector.shape_cast %113 : vector<256xf32> to vector<1x256xf32>
    %115 = arith.mulf %110, %110 : vector<64x256xf32>
    %cst_50 = arith.constant dense<0.000000e+00> : vector<256xf32>
    %116 = vector.multi_reduction <add>, %115, %cst_50 [0] : vector<64x256xf32> to vector<256xf32>
    %117 = vector.shape_cast %116 : vector<256xf32> to vector<1x256xf32>
    %cst_51 = arith.constant 1.562500e-02 : f32
    %118 = vector.broadcast %cst_51 : f32 to vector<1x256xf32>
    %119 = arith.mulf %114, %118 : vector<1x256xf32>
    %cst_52 = arith.constant 1.562500e-02 : f32
    %120 = vector.broadcast %cst_52 : f32 to vector<1x256xf32>
    %121 = arith.mulf %117, %120 : vector<1x256xf32>
    %122 = arith.mulf %119, %119 : vector<1x256xf32>
    %123 = arith.subf %121, %122 : vector<1x256xf32>
    %cst_53 = arith.constant 0.000000e+00 : f32
    %124 = vector.broadcast %cst_53 : f32 to vector<1x256xf32>
    %125 = arith.maximumf %123, %124 : vector<1x256xf32>
    %126 = vector.broadcast %119 : vector<1x256xf32> to vector<64x256xf32>
    %127 = arith.subf %110, %126 : vector<64x256xf32>
    %cst_54 = arith.constant 9.99999974E-6 : f32
    %128 = vector.broadcast %cst_54 : f32 to vector<1x256xf32>
    %129 = arith.addf %125, %128 : vector<1x256xf32>
    %130 = math.rsqrt %129 : vector<1x256xf32>
    %131 = vector.broadcast %130 : vector<1x256xf32> to vector<64x256xf32>
    %132 = arith.mulf %127, %131 : vector<64x256xf32>
    %133 = vector.broadcast %111 : vector<64x1xf32> to vector<64x256xf32>
    %134 = arith.mulf %132, %133 : vector<64x256xf32>
    %135 = vector.broadcast %112 : vector<64x1xf32> to vector<64x256xf32>
    %136 = arith.addf %134, %135 : vector<64x256xf32>
    %cst_55 = arith.constant 0.000000e+00 : f32
    %137 = vector.broadcast %cst_55 : f32 to vector<64x256xf32>
    %138 = arith.maximumf %136, %137 : vector<64x256xf32>
    %139 = arith.truncf %138 : vector<64x256xf32> to vector<64x256xbf16>
    %c0_56 = arith.constant 0 : index
    %c0_57 = arith.constant 0 : index
    %140 = vector.load %arg7[%c0_56, %c0_57] : memref<8x64xbf16, #tpu.memory_space<vmem>>, vector<8x64xbf16>
    %cst_58 = arith.constant dense<0.000000e+00> : vector<8x256xf32>
    %141 = tpu.matmul %140, %139, %cst_58 {dimension_numbers = #tpu.dot_dimension_numbers<[1], [0], [0], [1], [0, 0, 1, 1], [], []>} : vector<8x64xbf16>, vector<64x256xbf16>, vector<8x256xf32> -> vector<8x256xf32>
    %142 = vector.extract_strided_slice %141 {offsets = [0, 0], sizes = [1, 256], strides = [1, 1]} : vector<8x256xf32> to vector<1x256xf32>
    %c0_59 = arith.constant 0 : index
    %143 = memref.load %arg9[%c0_59] : memref<1xf32, #tpu.memory_space<smem>>
    %144 = vector.broadcast %143 : f32 to vector<1x256xf32>
    %145 = arith.addf %142, %144 : vector<1x256xf32>
    %146 = math.tanh %145 : vector<1x256xf32>
    %c0_60 = arith.constant 0 : index
    %c0_61 = arith.constant 0 : index
    %147 = vector.load %arg10[%c0_60, %c0_61] : memref<1x256xf32, #tpu.memory_space<vmem>>, vector<1x256xf32>
    tpu.vector_store %arg10[%c0_60, %c0_61], %146 {strides = array<i32>} : memref<1x256xf32, #tpu.memory_space<vmem>>, vector<1x256xf32>,
    return
  }
  func.func @transform_0(%arg0: i32) -> (i32, i32) {
    %c0_i32 = arith.constant 0 : i32
    %c0_i32_0 = arith.constant 0 : i32
    return %c0_i32, %arg0 : i32, i32
  }
  func.func @transform_1(%arg0: i32) -> (i32, i32) {
    %c0_i32 = arith.constant 0 : i32
    %c0_i32_0 = arith.constant 0 : i32
    %c0_i32_1 = arith.constant 0 : i32
    return %c0_i32, %c0_i32_0 : i32, i32
  }
  func.func @transform_2(%arg0: i32) -> (i32, i32) {
    %c0_i32 = arith.constant 0 : i32
    %c0_i32_0 = arith.constant 0 : i32
    %c0_i32_1 = arith.constant 0 : i32
    return %c0_i32, %c0_i32_0 : i32, i32
  }
  func.func @transform_3(%arg0: i32) -> (i32, i32) {
    %c0_i32 = arith.constant 0 : i32
    %c0_i32_0 = arith.constant 0 : i32
    %c0_i32_1 = arith.constant 0 : i32
    return %c0_i32, %c0_i32_0 : i32, i32
  }
  func.func @transform_4(%arg0: i32) -> (i32, i32) {
    %c0_i32 = arith.constant 0 : i32
    %c0_i32_0 = arith.constant 0 : i32
    %c0_i32_1 = arith.constant 0 : i32
    return %c0_i32, %c0_i32_0 : i32, i32
  }
  func.func @transform_5(%arg0: i32) -> (i32, i32) {
    %c0_i32 = arith.constant 0 : i32
    %c0_i32_0 = arith.constant 0 : i32
    %c0_i32_1 = arith.constant 0 : i32
    return %c0_i32, %c0_i32_0 : i32, i32
  }
  func.func @transform_6(%arg0: i32) -> (i32, i32) {
    %c0_i32 = arith.constant 0 : i32
    %c0_i32_0 = arith.constant 0 : i32
    %c0_i32_1 = arith.constant 0 : i32
    return %c0_i32, %c0_i32_0 : i32, i32
  }
  func.func @transform_7(%arg0: i32) -> (i32, i32) {
    %c0_i32 = arith.constant 0 : i32
    %c0_i32_0 = arith.constant 0 : i32
    %c0_i32_1 = arith.constant 0 : i32
    return %c0_i32, %c0_i32_0 : i32, i32
  }
  func.func @transform_8(%arg0: i32) -> i32 {
    %c0_i32 = arith.constant 0 : i32
    %c0_i32_0 = arith.constant 0 : i32
    return %c0_i32 : i32
  }
  func.func @transform_9(%arg0: i32) -> (i32, i32) {
    %c0_i32 = arith.constant 0 : i32
    %c0_i32_0 = arith.constant 0 : i32
    return %c0_i32, %arg0 : i32, i32
  }
}

</mosaic_0001>

<llo_original>
// kernel: decoder_forward.1
$region0: #{decoder_forward.1}
  #allocation0 [shape = 'u32[]', space=smem, size = 0x4, offset = 0x4, fixed_abs, tag = 'smem constant byte address 0x4 - core index']
  #allocation1 [shape = 'u32[72,128]{1,0:T(1,128)}', space=vmem, size = 0x9000, scoped, tag = 'internal scratch']
  #allocation2 [shape = 'f32[1]{0:T(128)S(6)}', space=smem, size = 0x200, scoped, tag = 'scoped memory for decoder_forward.1']
  %s0 = inlined_call_operand.vmem [shape: bf16[32,512], index: 0, kind: input, shape index: {}]
  %s1 = inlined_call_operand.vmem [shape: bf16[64,32], index: 1, kind: input, shape index: {}]
  %s2 = inlined_call_operand.vmem [shape: bf16[32,64], index: 2, kind: input, shape index: {}]
  %s3 = inlined_call_operand.vmem [shape: bf16[64,32], index: 3, kind: input, shape index: {}]
  %s4 = inlined_call_operand.vmem [shape: bf16[64,32], index: 4, kind: input, shape index: {}]
  %s5 = inlined_call_operand.vmem [shape: bf16[64,64], index: 5, kind: input, shape index: {}]
  %s6 = inlined_call_operand.vmem [shape: bf16[8,64], index: 6, kind: input, shape index: {}]
  %s7 = inlined_call_operand.vmem [shape: f32[64,12], index: 7, kind: input, shape index: {}]
  %s8 = inlined_call_operand.<no memory space> [shape: f32[1], index: 8, kind: input, shape index: {}]
  %s9 = inlined_call_operand.vmem [shape: f32[1,512], index: 9, kind: output, shape index: {}]
  %s10 = sld [smem:[#allocation0]]
  $region107: #{decoder_forward.1} parent=0
    _
  %s12 = ssub.s32 1, %s10
  %s13 = scalar_select 0, %s12, %s10
  %14 = sst [smem:[#allocation2]] %s8
  $region1: #{decoder_forward.1} parent=0
    #allocation3 [shape = 'u8[32768]{0}', space=vmem, size = 0x8000, scoped, tag = 'input window, operand 0']
    loop: start=0, step=1, limit=4
    $region2: #{decoder_forward.1} parent=1 // loop_pre_header
      _
    $region3: #{decoder_forward.1} parent=1 // loop_header
      %s16 = sphi 0, %s20
      %p17 = scmp.ge.s32.totalorder %s16, 4
      %s26 = sphi 0, %s28
      %s29 = sphi 0, %s26
      %s30 = sphi 0, %s29
      %s46 = sphi 0, %s30
      %s50 = sphi 0, %s50
      %s52 = sphi 0, %s50
      %s53 = sphi 0, %s52
      %s67 = sphi 0, %s53
      %s71 = sphi 0, %s71
      %s73 = sphi 0, %s71
      %s74 = sphi 0, %s73
      %s88 = sphi 0, %s74
      %s92 = sphi 0, %s92
      %s94 = sphi 0, %s92
      %s95 = sphi 0, %s94
      %s109 = sphi 0, %s95
      %s113 = sphi 0, %s113
      %s115 = sphi 0, %s113
      %s116 = sphi 0, %s115
      %s130 = sphi 0, %s116
      %s134 = sphi 0, %s134
      %s136 = sphi 0, %s134
      %s137 = sphi 0, %s136
      %s151 = sphi 0, %s137
      %s155 = sphi 0, %s155
      %s157 = sphi 0, %s155
      %s158 = sphi 0, %s157
      %s172 = sphi 0, %s158
      %s176 = sphi 0, %s176
      %s178 = sphi 0, %s176
      %s179 = sphi 0, %s178
      %s193 = sphi 0, %s179
      %s197 = sphi 0, %s197
      %s199 = sphi 0, %s197
      %s200 = sphi 0, %s199
      %s214 = sphi 0, %s200
      %s220 = sphi 0, %s222
      %s223 = sphi 0, %s220
      %s224 = sphi 0, %s223
      %s240 = sphi 0, %s224
    $region4: #{decoder_forward.1} parent=1 // loop_header_branch
      %19 = sbr.rel (%p17) target = $region8
    $region5: #{decoder_forward.1} parent=1 // loop_body
      %s21 = ssub.s32 %s16, 1
      %s22 = ssub.s32 %s16, 2
      %s23 = sadd.s32 %s16, 1
      %s24 = ssub.s32 %s16, %s23
      %p25 = scmp.eq.s32.totalorder %s24, 0
      %s27 = sadd.s32 %s26, 1
      %s28 = scalar_select %p25, %s26, %s27
      %p31 = pneg %p25
      %p32 = scmp.eq.s32.totalorder %s16, 1
      %p33 = por %p31, %p32
      %p34 = scmp.ne.s32.totalorder %s26, %s29
      %p35 = scmp.eq.s32.totalorder %s16, 0
      %p36 = por %p34, %p35
      %p37 = scmp.ne.s32.totalorder %s26, %s29
      %p38 = scmp.eq.s32.totalorder %s21, 1
      %p39 = por %p37, %p38
      %p40 = scmp.ne.s32.totalorder %s29, %s30
      %p41 = scmp.eq.s32.totalorder %s21, 0
      %p42 = por %p40, %p41
      %p43 = scmp.ne.s32.totalorder %s29, %s30
      %p44 = scmp.eq.s32.totalorder %s22, 1
      %p45 = por %p43, %p44
      %p47 = scmp.ne.s32.totalorder %s30, %s46
      %p48 = scmp.eq.s32.totalorder %s22, 0
      %p49 = por %p47, %p48
      %s51 = sadd.s32 %s50, 1
      %p54 = scmp.eq.s32.totalorder %s16, 1
      %p55 = scmp.ne.s32.totalorder %s50, %s52
      %p56 = scmp.eq.s32.totalorder %s16, 0
      %p57 = por %p55, %p56
      %p58 = scmp.ne.s32.totalorder %s50, %s52
      %p59 = scmp.eq.s32.totalorder %s21, 1
      %p60 = por %p58, %p59
      %p61 = scmp.ne.s32.totalorder %s52, %s53
      %p62 = scmp.eq.s32.totalorder %s21, 0
      %p63 = por %p61, %p62
      %p64 = scmp.ne.s32.totalorder %s52, %s53
      %p65 = scmp.eq.s32.totalorder %s22, 1
      %p66 = por %p64, %p65
      %p68 = scmp.ne.s32.totalorder %s53, %s67
      %p69 = scmp.eq.s32.totalorder %s22, 0
      %p70 = por %p68, %p69
      %s72 = sadd.s32 %s71, 1
      %p75 = scmp.eq.s32.totalorder %s16, 1
      %p76 = scmp.ne.s32.totalorder %s71, %s73
      %p77 = scmp.eq.s32.totalorder %s16, 0
      %p78 = por %p76, %p77
      %p79 = scmp.ne.s32.totalorder %s71, %s73
      %p80 = scmp.eq.s32.totalorder %s21, 1
      %p81 = por %p79, %p80
      %p82 = scmp.ne.s32.totalorder %s73, %s74
      %p83 = scmp.eq.s32.totalorder %s21, 0
      %p84 = por %p82, %p83
      %p85 = scmp.ne.s32.totalorder %s73, %s74
      %p86 = scmp.eq.s32.totalorder %s22, 1
      %p87 = por %p85, %p86
      %p89 = scmp.ne.s32.totalorder %s74, %s88
      %p90 = scmp.eq.s32.totalorder %s22, 0
      %p91 = por %p89, %p90
      %s93 = sadd.s32 %s92, 1
      %p96 = scmp.eq.s32.totalorder %s16, 1
      %p97 = scmp.ne.s32.totalorder %s92, %s94
      %p98 = scmp.eq.s32.totalorder %s16, 0
      %p99 = por %p97, %p98
      %p100 = scmp.ne.s32.totalorder %s92, %s94
      %p101 = scmp.eq.s32.totalorder %s21, 1
      %p102 = por %p100, %p101
      %p103 = scmp.ne.s32.totalorder %s94, %s95
      %p104 = scmp.eq.s32.totalorder %s21, 0
      %p105 = por %p103, %p104
      %p106 = scmp.ne.s32.totalorder %s94, %s95
      %p107 = scmp.eq.s32.totalorder %s22, 1
      %p108 = por %p106, %p107
      %p110 = scmp.ne.s32.totalorder %s95, %s109
      %p111 = scmp.eq.s32.totalorder %s22, 0
      %p112 = por %p110, %p111
      %s114 = sadd.s32 %s113, 1
      %p117 = scmp.eq.s32.totalorder %s16, 1
      %p118 = scmp.ne.s32.totalorder %s113, %s115
      %p119 = scmp.eq.s32.totalorder %s16, 0
      %p120 = por %p118, %p119
      %p121 = scmp.ne.s32.totalorder %s113, %s115
      %p122 = scmp.eq.s32.totalorder %s21, 1
      %p123 = por %p121, %p122
      %p124 = scmp.ne.s32.totalorder %s115, %s116
      %p125 = scmp.eq.s32.totalorder %s21, 0
      %p126 = por %p124, %p125
      %p127 = scmp.ne.s32.totalorder %s115, %s116
      %p128 = scmp.eq.s32.totalorder %s22, 1
      %p129 = por %p127, %p128
      %p131 = scmp.ne.s32.totalorder %s116, %s130
      %p132 = scmp.eq.s32.totalorder %s22, 0
      %p133 = por %p131, %p132
      %s135 = sadd.s32 %s134, 1
      %p138 = scmp.eq.s32.totalorder %s16, 1
      %p139 = scmp.ne.s32.totalorder %s134, %s136
      %p140 = scmp.eq.s32.totalorder %s16, 0
      %p141 = por %p139, %p140
      %p142 = scmp.ne.s32.totalorder %s134, %s136
      %p143 = scmp.eq.s32.totalorder %s21, 1
      %p144 = por %p142, %p143
      %p145 = scmp.ne.s32.totalorder %s136, %s137
      %p146 = scmp.eq.s32.totalorder %s21, 0
      %p147 = por %p145, %p146
      %p148 = scmp.ne.s32.totalorder %s136, %s137
      %p149 = scmp.eq.s32.totalorder %s22, 1
      %p150 = por %p148, %p149
      %p152 = scmp.ne.s32.totalorder %s137, %s151
      %p153 = scmp.eq.s32.totalorder %s22, 0
      %p154 = por %p152, %p153
      %s156 = sadd.s32 %s155, 1
      %p159 = scmp.eq.s32.totalorder %s16, 1
      %p160 = scmp.ne.s32.totalorder %s155, %s157
      %p161 = scmp.eq.s32.totalorder %s16, 0
      %p162 = por %p160, %p161
      %p163 = scmp.ne.s32.totalorder %s155, %s157
      %p164 = scmp.eq.s32.totalorder %s21, 1
      %p165 = por %p163, %p164
      %p166 = scmp.ne.s32.totalorder %s157, %s158
      %p167 = scmp.eq.s32.totalorder %s21, 0
      %p168 = por %p166, %p167
      %p169 = scmp.ne.s32.totalorder %s157, %s158
      %p170 = scmp.eq.s32.totalorder %s22, 1
      %p171 = por %p169, %p170
      %p173 = scmp.ne.s32.totalorder %s158, %s172
      %p174 = scmp.eq.s32.totalorder %s22, 0
      %p175 = por %p173, %p174
      %s177 = sadd.s32 %s176, 1
      %p180 = scmp.eq.s32.totalorder %s16, 1
      %p181 = scmp.ne.s32.totalorder %s176, %s178
      %p182 = scmp.eq.s32.totalorder %s16, 0
      %p183 = por %p181, %p182
      %p184 = scmp.ne.s32.totalorder %s176, %s178
      %p185 = scmp.eq.s32.totalorder %s21, 1
      %p186 = por %p184, %p185
      %p187 = scmp.ne.s32.totalorder %s178, %s179
      %p188 = scmp.eq.s32.totalorder %s21, 0
      %p189 = por %p187, %p188
      %p190 = scmp.ne.s32.totalorder %s178, %s179
      %p191 = scmp.eq.s32.totalorder %s22, 1
      %p192 = por %p190, %p191
      %p194 = scmp.ne.s32.totalorder %s179, %s193
      %p195 = scmp.eq.s32.totalorder %s22, 0
      %p196 = por %p194, %p195
      %s198 = sadd.s32 %s197, 1
      %p201 = scmp.eq.s32.totalorder %s16, 1
      %p202 = scmp.ne.s32.totalorder %s197, %s199
      %p203 = scmp.eq.s32.totalorder %s16, 0
      %p204 = por %p202, %p203
      %p205 = scmp.ne.s32.totalorder %s197, %s199
      %p206 = scmp.eq.s32.totalorder %s21, 1
      %p207 = por %p205, %p206
      %p208 = scmp.ne.s32.totalorder %s199, %s200
      %p209 = scmp.eq.s32.totalorder %s21, 0
      %p210 = por %p208, %p209
      %p211 = scmp.ne.s32.totalorder %s199, %s200
      %p212 = scmp.eq.s32.totalorder %s22, 1
      %p213 = por %p211, %p212
      %p215 = scmp.ne.s32.totalorder %s200, %s214
      %p216 = scmp.eq.s32.totalorder %s22, 0
      %p217 = por %p215, %p216
      %s218 = ssub.s32 %s16, %s23
      %p219 = scmp.eq.s32.totalorder %s218, 0
      %s221 = sadd.s32 %s220, 1
      %s222 = scalar_select %p219, %s220, %s221
      %p225 = pneg %p219
      %p226 = scmp.eq.s32.totalorder %s16, 1
      %p227 = por %p225, %p226
      %p228 = scmp.ne.s32.totalorder %s220, %s223
      %p229 = scmp.eq.s32.totalorder %s16, 0
      %p230 = por %p228, %p229
      %p231 = scmp.ne.s32.totalorder %s220, %s223
      %p232 = scmp.eq.s32.totalorder %s21, 1
      %p233 = por %p231, %p232
      %p234 = scmp.ne.s32.totalorder %s223, %s224
      %p235 = scmp.eq.s32.totalorder %s21, 0
      %p236 = por %p234, %p235
      %p237 = scmp.ne.s32.totalorder %s223, %s224
      %p238 = scmp.eq.s32.totalorder %s22, 1
      %p239 = por %p237, %p238
      %p241 = scmp.ne.s32.totalorder %s224, %s240
      %p242 = scmp.eq.s32.totalorder %s22, 0
      %p243 = por %p241, %p242
      %p244 = scmp.le.s32.totalorder 1, %s16
      %p245 = scmp.lt.s32.totalorder %s16, 3
      %p246 = pnand %p244, %p245
      %p247 = pneg %p246
      // Predicated region
      $region9: #{decoder_forward.1} parent=5 // pred_check
        _
      $region10: #{decoder_forward.1} parent=5 // pred_check_branch
        %249 = sbr.rel (%p246) target = $region12
      $region11: #{decoder_forward.1} parent=5 // pred_region
        %s250 = ssub.s32 %s16, 1
        // Predicated region
        $region13: #{decoder_forward.1} parent=11 // pred_check
          %p251 = pneg %p63
        $region14: #{decoder_forward.1} parent=11 // pred_check_branch
          %253 = sbr.rel (%p251) target = $region16
        $region15: #{decoder_forward.1} parent=11 // pred_region
          _
        $region16: #{decoder_forward.1} parent=11 // pred_fallthru
          _
        // Predicated region
        $region17: #{decoder_forward.1} parent=11 // pred_check
          %p254 = pneg %p84
        $region18: #{decoder_forward.1} parent=11 // pred_check_branch
          %256 = sbr.rel (%p254) target = $region20
        $region19: #{decoder_forward.1} parent=11 // pred_region
          _
        $region20: #{decoder_forward.1} parent=11 // pred_fallthru
          _
        // Predicated region
        $region21: #{decoder_forward.1} parent=11 // pred_check
          %p257 = pneg %p105
        $region22: #{decoder_forward.1} parent=11 // pred_check_branch
          %259 = sbr.rel (%p257) target = $region24
        $region23: #{decoder_forward.1} parent=11 // pred_region
          _
        $region24: #{decoder_forward.1} parent=11 // pred_fallthru
          _
        // Predicated region
        $region25: #{decoder_forward.1} parent=11 // pred_check
          %p260 = pneg %p126
        $region26: #{decoder_forward.1} parent=11 // pred_check_branch
          %262 = sbr.rel (%p260) target = $region28
        $region27: #{decoder_forward.1} parent=11 // pred_region
          _
        $region28: #{decoder_forward.1} parent=11 // pred_fallthru
          _
        // Predicated region
        $region29: #{decoder_forward.1} parent=11 // pred_check
          %p263 = pneg %p147
        $region30: #{decoder_forward.1} parent=11 // pred_check_branch
          %265 = sbr.rel (%p263) target = $region32
        $region31: #{decoder_forward.1} parent=11 // pred_region
          _
        $region32: #{decoder_forward.1} parent=11 // pred_fallthru
          _
        // Predicated region
        $region33: #{decoder_forward.1} parent=11 // pred_check
          %p266 = pneg %p168
        $region34: #{decoder_forward.1} parent=11 // pred_check_branch
          %268 = sbr.rel (%p266) target = $region36
        $region35: #{decoder_forward.1} parent=11 // pred_region
          _
        $region36: #{decoder_forward.1} parent=11 // pred_fallthru
          _
        // Predicated region
        $region37: #{decoder_forward.1} parent=11 // pred_check
          %p269 = pneg %p189
        $region38: #{decoder_forward.1} parent=11 // pred_check_branch
          %271 = sbr.rel (%p269) target = $region40
        $region39: #{decoder_forward.1} parent=11 // pred_region
          _
        $region40: #{decoder_forward.1} parent=11 // pred_fallthru
          _
        // Predicated region
        $region41: #{decoder_forward.1} parent=11 // pred_check
          %p272 = pneg %p210
        $region42: #{decoder_forward.1} parent=11 // pred_check_branch
          %274 = sbr.rel (%p272) target = $region44
        $region43: #{decoder_forward.1} parent=11 // pred_region
          _
        $region44: #{decoder_forward.1} parent=11 // pred_fallthru
          _
      $region12: #{decoder_forward.1} parent=5 // pred_fallthru
        _
      %p275 = scmp.lt.s32.totalorder %s16, 2
      // Predicated region
      $region45: #{decoder_forward.1} parent=5 // pred_check
        %p276 = pneg %p275
      $region46: #{decoder_forward.1} parent=5 // pred_check_branch
        %278 = sbr.rel (%p276) target = $region48
      $region47: #{decoder_forward.1} parent=5 // pred_region
        // Predicated region
        $region49: #{decoder_forward.1} parent=47 // pred_check
          %p279 = pneg %p36
        $region50: #{decoder_forward.1} parent=47 // pred_check_branch
          %281 = sbr.rel (%p279) target = $region52
        $region51: #{decoder_forward.1} parent=47 // pred_region
          %s282 = sand.u32 %s26, 1
          %s283 = sand.u32 %s26, 1
          %s284 = smul.addr %s283, 32
          %s285 = scalar_lea.vmem [#allocation3], %s284
          %s286 = smul.u32 2, %s16
          %s287 = smul.addr %s286, 4
          %s288 = scalar_lea.vmem %s0, %s287
          // Predicated region
          $region53: #{decoder_forward.1} parent=51 // pred_check
            _
          $region54: #{decoder_forward.1} parent=51 // pred_check_branch
            %290 = sbr.rel (0) target = $region56
          $region55: #{decoder_forward.1} parent=51 // pred_region
            // Predicated region
            $region57: #{decoder_forward.1} parent=55 // pred_check
              _
            $region58: #{decoder_forward.1} parent=55 // pred_check_branch
              %292 = sbr.rel (0) target = $region60
            $region59: #{decoder_forward.1} parent=55 // pred_region
              // Predicated region
              $region72: #{decoder_forward.1} parent=59 // pred_check
                _
              $region73: #{decoder_forward.1} parent=59 // pred_check_branch
                %314 = sbr.rel (0) target = $region75
              $region74: #{decoder_forward.1} parent=59 // pred_region
                loop: start=0, step=1, limit=1
                $region76: #{decoder_forward.1} parent=74 // loop_pre_header
                  _
                $region77: #{decoder_forward.1} parent=74 // loop_header
                  %s316 = sphi 0, %s320
                  %p317 = scmp.ge.s32.totalorder %s316, 1
                  %s321 = sphi %s288, %s288
                  %s322 = sphi %s285, %s285
                $region78: #{decoder_forward.1} parent=74 // loop_header_branch
                  %319 = sbr.rel (%p317) target = $region82
                $region79: #{decoder_forward.1} parent=74 // loop_body
                  %v323 = vld [vmem:[%s321] sm:$0xff]
                  %324 = vst [vmem:[%s322] sm:$0xff] %v323
                  %v325 = vld [vmem:[%s321 + $0x10] sm:$0xff]
                  %326 = vst [vmem:[%s322 + $0x8] sm:$0xff] %v325
                  %v327 = vld [vmem:[%s321 + $0x20] sm:$0xff]
                  %328 = vst [vmem:[%s322 + $0x10] sm:$0xff] %v327
                  %v329 = vld [vmem:[%s321 + $0x30] sm:$0xff]
                  %330 = vst [vmem:[%s322 + $0x18] sm:$0xff] %v329
                $region80: #{decoder_forward.1} parent=74 // loop_footer
                  %s320 = sadd.s32 1, %s316
                $region81: #{decoder_forward.1} parent=74 // loop_footer_branch
                  %315 = sbr.rel target = $region77
                $region82: #{decoder_forward.1} parent=74 // loop_exit
                  _
              $region75: #{decoder_forward.1} parent=59 // pred_fallthru
                _
              // Predicated region
              $region83: #{decoder_forward.1} parent=59 // pred_check
                _
              $region84: #{decoder_forward.1} parent=59 // pred_check_branch
                %332 = sbr.rel target = $region86
              $region85: #{decoder_forward.1} parent=59 // pred_region
                _
              $region86: #{decoder_forward.1} parent=59 // pred_fallthru
                _
            $region60: #{decoder_forward.1} parent=55 // pred_fallthru
              _
            // Predicated region
            $region61: #{decoder_forward.1} parent=55 // pred_check
              _
            $region62: #{decoder_forward.1} parent=55 // pred_check_branch
              %294 = sbr.rel target = $region64
            $region63: #{decoder_forward.1} parent=55 // pred_region
              %s296 = ssub.s32 256, 1
              loop: start=0, step=1, limit=1
              $region65: #{decoder_forward.1} parent=63 // loop_pre_header
                _
              $region66: #{decoder_forward.1} parent=63 // loop_header
                %s298 = sphi 0, %s302
                %p299 = scmp.ge.s32.totalorder %s298, 1
                %s303 = sphi %s288, %s288
                %s304 = sphi %s285, %s285
              $region67: #{decoder_forward.1} parent=63 // loop_header_branch
                %301 = sbr.rel (%p299) target = $region71
              $region68: #{decoder_forward.1} parent=63 // loop_body
                %v305 = vld [vmem:[%s303] sm:%s296]
                %306 = vst [vmem:[%s304] sm:%s296] %v305
                %v307 = vld [vmem:[%s303 + $0x10] sm:%s296]
                %308 = vst [vmem:[%s304 + $0x8] sm:%s296] %v307
                %v309 = vld [vmem:[%s303 + $0x20] sm:%s296]
                %310 = vst [vmem:[%s304 + $0x10] sm:%s296] %v309
                %v311 = vld [vmem:[%s303 + $0x30] sm:%s296]
                %312 = vst [vmem:[%s304 + $0x18] sm:%s296] %v311
              $region69: #{decoder_forward.1} parent=63 // loop_footer
                %s302 = sadd.s32 1, %s298
              $region70: #{decoder_forward.1} parent=63 // loop_footer_branch
                %297 = sbr.rel target = $region66
              $region71: #{decoder_forward.1} parent=63 // loop_exit
                _
            $region64: #{decoder_forward.1} parent=55 // pred_fallthru
              _
          $region56: #{decoder_forward.1} parent=51 // pred_fallthru
            _
          %333 = vnop
        $region52: #{decoder_forward.1} parent=47 // pred_fallthru
          _
      $region48: #{decoder_forward.1} parent=5 // pred_fallthru
        _
      %p334 = scmp.le.s32.totalorder 1, %s16
      %p335 = scmp.lt.s32.totalorder %s16, 3
      %p336 = pnand %p334, %p335
      %p337 = pneg %p336
      // Predicated region
      $region87: #{decoder_forward.1} parent=5 // pred_check
        _
      $region88: #{decoder_forward.1} parent=5 // pred_check_branch
        %339 = sbr.rel (%p336) target = $region90
      $region89: #{decoder_forward.1} parent=5 // pred_region
        %s340 = ssub.s32 %s16, 1
        %s341 = sand.u32 %s29, 1
        %s342 = sand.u32 %s29, 1
        %s343 = smul.addr %s342, 32
        %s344 = scalar_lea.vmem [#allocation3], %s343
        // Predicated region
        $region91: #{decoder_forward.1} parent=89 // pred_check
          %p345 = pneg %p42
        $region92: #{decoder_forward.1} parent=89 // pred_check_branch
          %347 = sbr.rel (%p345) target = $region94
        $region93: #{decoder_forward.1} parent=89 // pred_region
          _
        $region94: #{decoder_forward.1} parent=89 // pred_fallthru
          _
        %s348 = sand.u32 %s29, 1
        %s349 = sand.u32 %s29, 1
        %s350 = smul.addr %s349, 32
        %s351 = scalar_lea.vmem [#allocation3], %s350
        %p352 = pneg %p42
        %p353 = pneg %p39
        %p354 = pneg %p63
        %p355 = pneg %p60
        %p356 = pneg %p84
        %p357 = pneg %p81
        %p358 = pneg %p105
        %p359 = pneg %p102
        %p360 = pneg %p126
        %p361 = pneg %p123
        %p362 = pneg %p147
        %p363 = pneg %p144
        %p364 = pneg %p168
        %p365 = pneg %p165
        %p366 = pneg %p189
        %p367 = pneg %p186
        %p368 = pneg %p210
        %p369 = pneg %p207
        %p370 = pneg %p236
        %p371 = pneg %p233
        %s372 = smul.u32 2, %s21
        %p373 = scmp.lt.s32.totalorder %s372, 3
        %s374 = scalar_select %p373, %s372, 3
        %s375 = scalar_lea.vmem %s9, %s374
        %s376 = smul.u32 2, %s21
        %s377 = smul.u32 2, %s21
        %p378 = scmp.lt.s32.totalorder %s377, 3
        %s379 = scalar_select %p378, %s377, 3
        %s380 = scalar_lea.vmem %s9, %s379
        %s381 = smul.u32 2, %s21
        %v383 = vld [vmem:[%s344] sm:$0xff]
        %v384 = vld [vmem:[%s344 + $0x8] sm:$0xff]
        %v385 = vld [vmem:[%s344 + $0x10] sm:$0xff]
        %v386 = vld [vmem:[%s344 + $0x18] sm:$0xff]
        %v387 = vld [vmem:[%s1] sm:$0xf]
        %v388 = vld [vmem:[%s1 + $0x4] sm:$0xf]
        %v389 = vld [vmem:[%s1 + $0x8] sm:$0xf]
        %v390 = vld [vmem:[%s1 + $0xc] sm:$0xf]
        %v391 = vld [vmem:[%s1 + $0x10] sm:$0xf]
        %v392 = vld [vmem:[%s1 + $0x14] sm:$0xf]
        %v393 = vld [vmem:[%s1 + $0x18] sm:$0xf]
        %v394 = vld [vmem:[%s1 + $0x1c] sm:$0xf]
        %v395 = vld [vmem:[%s7] sm:$0xff]
        %v396 = vld [vmem:[%s7 + $0x8] sm:$0xff]
        %v397 = vld [vmem:[%s7 + $0x10] sm:$0xff]
        %v398 = vld [vmem:[%s7 + $0x18] sm:$0xff]
        %v399 = vld [vmem:[%s7 + $0x20] sm:$0xff]
        %v400 = vld [vmem:[%s7 + $0x28] sm:$0xff]
        %v401 = vld [vmem:[%s7 + $0x30] sm:$0xff]
        %v402 = vld [vmem:[%s7 + $0x38] sm:$0xff]
        %404 = vset.pattern.permute.xlu0 0
        %405 = vperm.xlu0 %404, %v395
        %v406 = vpop.permute.xlu0 %405
        %409 = vset.pattern.permute.xlu0 0
        %410 = vperm.xlu0 %409, %v396
        %v411 = vpop.permute.xlu0 %410
        %414 = vset.pattern.permute.xlu0 0
        %415 = vperm.xlu0 %414, %v397
        %v416 = vpop.permute.xlu0 %415
        %419 = vset.pattern.permute.xlu0 0
        %420 = vperm.xlu0 %419, %v398
        %v421 = vpop.permute.xlu0 %420
        %424 = vset.pattern.permute.xlu0 0
        %425 = vperm.xlu0 %424, %v399
        %v426 = vpop.permute.xlu0 %425
        %429 = vset.pattern.permute.xlu0 0
        %430 = vperm.xlu0 %429, %v400
        %v431 = vpop.permute.xlu0 %430
        %434 = vset.pattern.permute.xlu0 0
        %435 = vperm.xlu0 %434, %v401
        %v436 = vpop.permute.xlu0 %435
        %439 = vset.pattern.permute.xlu0 0
        %440 = vperm.xlu0 %439, %v402
        %v441 = vpop.permute.xlu0 %440
        %v451 = vunpack.c.l.b16 %v387
        %v452 = vunpack.c.l.b16 %v388
        %v453 = vunpack.c.l.b16 %v389
        %v454 = vunpack.c.l.b16 %v390
        %v455 = vunpack.c.l.b16 %v391
        %v456 = vunpack.c.l.b16 %v392
        %v457 = vunpack.c.l.b16 %v393
        %v458 = vunpack.c.l.b16 %v394
        %v459 = vpack.c.b16 %v452, %v451
        %v460 = vpack.c.b16 %v454, %v453
        %v461 = vpack.c.b16 %v456, %v455
        %v462 = vpack.c.b16 %v458, %v457
        %v467 = vunpack.c.l.b16 %v383
        %v468 = vunpack.c.h.b16 %v383
        %v469 = vunpack.c.l.b16 %v384
        %v470 = vunpack.c.h.b16 %v384
        %v471 = vunpack.c.l.b16 %v385
        %v472 = vunpack.c.h.b16 %v385
        %v473 = vunpack.c.l.b16 %v386
        %v474 = vunpack.c.h.b16 %v386
        %v475 = vpack.c.b16 %v469, %v467
        %v476 = vpack.c.b16 %v470, %v468
        %v477 = vpack.c.b16 %v473, %v471
        %v478 = vpack.c.b16 %v474, %v472
        %vm483 = vcmask 261120
        %v485 = vsel %vm483, %v459, 0
        %v488 = vsel %vm483, %v460, 0
        %v491 = vsel %vm483, %v461, 0
        %v494 = vsel %vm483, %v462, 0
        %496 = vmatpush.bf16.msra.mxu0 0
        %497 = vmatpush.bf16.msra.mxu0 0
        %498 = vmatpush.bf16.msra.mxu0 0
        %499 = vmatpush.bf16.msra.mxu0 0
        %500 = vmatpush.bf16.msra.mxu0 0
        %501 = vmatpush.bf16.msra.mxu0 0
        %502 = vmatpush.bf16.msra.mxu0 %v477
        %503 = vmatpush.bf16.msra.mxu0 %v475
        %504 = vmatmul.bf16.gmra.mxu0 %v485
        %v505 = vpop.f32.mrf.mxu0
        %v506 = vadd.f32 %v406, %v505
        %v507 = vpop.f32.mrf.mxu0
        %v508 = vadd.f32 %v411, %v507
        %509 = vmatmul.bf16.gmra.mxu0 %v488
        %v510 = vpop.f32.mrf.mxu0
        %v511 = vadd.f32 %v416, %v510
        %v512 = vpop.f32.mrf.mxu0
        %v513 = vadd.f32 %v421, %v512
        %514 = vmatmul.bf16.gmra.mxu0 %v491
        %v515 = vpop.f32.mrf.mxu0
        %v516 = vadd.f32 %v426, %v515
        %v517 = vpop.f32.mrf.mxu0
        %v518 = vadd.f32 %v431, %v517
        %519 = vmatmul.bf16.gmra.mxu0 %v494
        %v520 = vpop.f32.mrf.mxu0
        %v521 = vadd.f32 %v436, %v520
        %v522 = vpop.f32.mrf.mxu0
        %v523 = vadd.f32 %v441, %v522
        %524 = vdwg.mxu0
        %525 = vmatpush.bf16.msra.mxu0 0
        %526 = vmatpush.bf16.msra.mxu0 0
        %527 = vmatpush.bf16.msra.mxu0 0
        %528 = vmatpush.bf16.msra.mxu0 0
        %529 = vmatpush.bf16.msra.mxu0 0
        %530 = vmatpush.bf16.msra.mxu0 0
        %531 = vmatpush.bf16.msra.mxu0 %v478
        %532 = vmatpush.bf16.msra.mxu0 %v476
        %533 = vmatmul.bf16.gmra.mxu0 %v485
        %v534 = vpop.f32.mrf.mxu0
        %v535 = vadd.f32 %v406, %v534
        %v536 = vpop.f32.mrf.mxu0
        %v537 = vadd.f32 %v411, %v536
        %538 = vmatmul.bf16.gmra.mxu0 %v488
        %v539 = vpop.f32.mrf.mxu0
        %v540 = vadd.f32 %v416, %v539
        %v541 = vpop.f32.mrf.mxu0
        %v542 = vadd.f32 %v421, %v541
        %543 = vmatmul.bf16.gmra.mxu0 %v491
        %v544 = vpop.f32.mrf.mxu0
        %v545 = vadd.f32 %v426, %v544
        %v546 = vpop.f32.mrf.mxu0
        %v547 = vadd.f32 %v431, %v546
        %548 = vmatmul.bf16.gmra.mxu0 %v494
        %v549 = vpop.f32.mrf.mxu0
        %v550 = vadd.f32 %v436, %v549
        %v551 = vpop.f32.mrf.mxu0
        %v552 = vadd.f32 %v441, %v551
        %553 = vdwg.mxu0
        %v554 = vadd.f32 %v506, %v508
        %v555 = vadd.f32 %v554, %v511
        %v556 = vadd.f32 %v555, %v513
        %v557 = vadd.f32 %v556, %v516
        %v558 = vadd.f32 %v557, %v518
        %v559 = vadd.f32 %v558, %v521
        %v560 = vadd.f32 %v559, %v523
        %v561 = vrot.slane %v560, 4
        %v562 = vadd.f32 %v560, %v561
        %v563 = vrot.slane %v562, 2
        %v564 = vadd.f32 %v562, %v563
        %v565 = vrot.slane %v564, 1
        %v566 = vadd.f32 %v564, %v565
        %v567 = vadd.f32 %v535, %v537
        %v568 = vadd.f32 %v567, %v540
        %v569 = vadd.f32 %v568, %v542
        %v570 = vadd.f32 %v569, %v545
        %v571 = vadd.f32 %v570, %v547
        %v572 = vadd.f32 %v571, %v550
        %v573 = vadd.f32 %v572, %v552
        %v574 = vrot.slane %v573, 4
        %v575 = vadd.f32 %v573, %v574
        %v576 = vrot.slane %v575, 2
        %v577 = vadd.f32 %v575, %v576
        %v578 = vrot.slane %v577, 1
        %v579 = vadd.f32 %v577, %v578
        %v580 = vmul.f32 %v506, %v506
        %v581 = vmul.f32 %v535, %v535
        %v582 = vmul.f32 %v508, %v508
        %v583 = vmul.f32 %v537, %v537
        %v584 = vmul.f32 %v511, %v511
        %v585 = vmul.f32 %v540, %v540
        %v586 = vmul.f32 %v513, %v513
        %v587 = vmul.f32 %v542, %v542
        %v588 = vmul.f32 %v516, %v516
        %v589 = vmul.f32 %v545, %v545
        %v590 = vmul.f32 %v518, %v518
        %v591 = vmul.f32 %v547, %v547
        %v592 = vmul.f32 %v521, %v521
        %v593 = vmul.f32 %v550, %v550
        %v594 = vmul.f32 %v523, %v523
        %v595 = vmul.f32 %v552, %v552
        %v596 = vadd.f32 %v580, %v582
        %v597 = vadd.f32 %v596, %v584
        %v598 = vadd.f32 %v597, %v586
        %v599 = vadd.f32 %v598, %v588
        %v600 = vadd.f32 %v599, %v590
        %v601 = vadd.f32 %v600, %v592
        %v602 = vadd.f32 %v601, %v594
        %v603 = vrot.slane %v602, 4
        %v604 = vadd.f32 %v602, %v603
        %v605 = vrot.slane %v604, 2
        %v606 = vadd.f32 %v604, %v605
        %v607 = vrot.slane %v606, 1
        %v608 = vadd.f32 %v606, %v607
        %v609 = vadd.f32 %v581, %v583
        %v610 = vadd.f32 %v609, %v585
        %v611 = vadd.f32 %v610, %v587
        %v612 = vadd.f32 %v611, %v589
        %v613 = vadd.f32 %v612, %v591
        %v614 = vadd.f32 %v613, %v593
        %v615 = vadd.f32 %v614, %v595
        %v616 = vrot.slane %v615, 4
        %v617 = vadd.f32 %v615, %v616
        %v618 = vrot.slane %v617, 2
        %v619 = vadd.f32 %v617, %v618
        %v620 = vrot.slane %v619, 1
        %v621 = vadd.f32 %v619, %v620
        %v622 = vmul.f32 %v566, 0.015625
        %v623 = vmul.f32 %v579, 0.015625
        %v624 = vmul.f32 %v608, 0.015625
        %v625 = vmul.f32 %v621, 0.015625
        %v626 = vmul.f32 %v622, %v622
        %v627 = vmul.f32 %v623, %v623
        %v628 = vsub.f32 %v624, %v626
        %v629 = vsub.f32 %v625, %v627
        %v630 = vmax.f32 %v628, 0.0
        %v631 = vmax.f32 %v629, 0.0
        %v632 = vsub.f32 %v506, %v622
        %v633 = vsub.f32 %v535, %v623
        %v634 = vsub.f32 %v508, %v622
        %v635 = vsub.f32 %v537, %v623
        %v636 = vsub.f32 %v511, %v622
        %v637 = vsub.f32 %v540, %v623
        %v638 = vsub.f32 %v513, %v622
        %v639 = vsub.f32 %v542, %v623
        %v640 = vsub.f32 %v516, %v622
        %v641 = vsub.f32 %v545, %v623
        %v642 = vsub.f32 %v518, %v622
        %v643 = vsub.f32 %v547, %v623
        %v644 = vsub.f32 %v521, %v622
        %v645 = vsub.f32 %v550, %v623
        %v646 = vsub.f32 %v523, %v622
        %v647 = vsub.f32 %v552, %v623
        %v648 = vadd.f32 %v630, 1e-05
        %v649 = vadd.f32 %v631, 1e-05
        %v650 = vrsqrt.pop %v648
        %v651 = vmul.f32 %v650, %v648
        %v652 = vmul.f32 %v651, %v650
        %v653 = vmul.f32 0.5, %v652
        %v654 = vsub.f32 1.5, %v653
        %v655 = vmul.f32 %v650, %v654
        %vm656 = vweird.f32 %v648
        %vm657 = vweird.f32 %v650
        %vm658 = vmor %vm656, %vm657
        %v659 = vsel %vm658, %v650, %v655
        %v660 = vrsqrt.pop %v649
        %v661 = vmul.f32 %v660, %v649
        %v662 = vmul.f32 %v661, %v660
        %v663 = vmul.f32 0.5, %v662
        %v664 = vsub.f32 1.5, %v663
        %v665 = vmul.f32 %v660, %v664
        %vm666 = vweird.f32 %v649
        %vm667 = vweird.f32 %v660
        %vm668 = vmor %vm666, %vm667
        %v669 = vsel %vm668, %v660, %v665
        %v670 = vmul.f32 %v632, %v659
        %v671 = vmul.f32 %v633, %v669
        %v672 = vmul.f32 %v634, %v659
        %v673 = vmul.f32 %v635, %v669
        %v674 = vmul.f32 %v636, %v659
        %v675 = vmul.f32 %v637, %v669
        %v676 = vmul.f32 %v638, %v659
        %v677 = vmul.f32 %v639, %v669
        %v678 = vmul.f32 %v640, %v659
        %v679 = vmul.f32 %v641, %v669
        %v680 = vmul.f32 %v642, %v659
        %v681 = vmul.f32 %v643, %v669
        %v682 = vmul.f32 %v644, %v659
        %v683 = vmul.f32 %v645, %v669
        %v684 = vmul.f32 %v646, %v659
        %v685 = vmul.f32 %v647, %v669
        %686 = vset.pattern.permute.xlu0 1
        %687 = vperm.xlu0 %686, %v395
        %v688 = vpop.permute.xlu0 %687
        %690 = vset.pattern.permute.xlu0 1
        %691 = vperm.xlu0 %690, %v396
        %v692 = vpop.permute.xlu0 %691
        %694 = vset.pattern.permute.xlu0 1
        %695 = vperm.xlu0 %694, %v397
        %v696 = vpop.permute.xlu0 %695
        %698 = vset.pattern.permute.xlu0 1
        %699 = vperm.xlu0 %698, %v398
        %v700 = vpop.permute.xlu0 %699
        %702 = vset.pattern.permute.xlu0 1
        %703 = vperm.xlu0 %702, %v399
        %v704 = vpop.permute.xlu0 %703
        %706 = vset.pattern.permute.xlu0 1
        %707 = vperm.xlu0 %706, %v400
        %v708 = vpop.permute.xlu0 %707
        %710 = vset.pattern.permute.xlu0 1
        %711 = vperm.xlu0 %710, %v401
        %v712 = vpop.permute.xlu0 %711
        %714 = vset.pattern.permute.xlu0 1
        %715 = vperm.xlu0 %714, %v402
        %v716 = vpop.permute.xlu0 %715
        %v718 = vmul.f32 %v670, %v688
        %v719 = vmul.f32 %v671, %v688
        %v720 = vmul.f32 %v672, %v692
        %v721 = vmul.f32 %v673, %v692
        %v722 = vmul.f32 %v674, %v696
        %v723 = vmul.f32 %v675, %v696
        %v724 = vmul.f32 %v676, %v700
        %v725 = vmul.f32 %v677, %v700
        %v726 = vmul.f32 %v678, %v704
        %v727 = vmul.f32 %v679, %v704
        %v728 = vmul.f32 %v680, %v708
        %v729 = vmul.f32 %v681, %v708
        %v730 = vmul.f32 %v682, %v712
        %v731 = vmul.f32 %v683, %v712
        %v732 = vmul.f32 %v684, %v716
        %v733 = vmul.f32 %v685, %v716
        %734 = vset.pattern.permute.xlu0 2
        %735 = vperm.xlu0 %734, %v395
        %v736 = vpop.permute.xlu0 %735
        %738 = vset.pattern.permute.xlu0 2
        %739 = vperm.xlu0 %738, %v396
        %v740 = vpop.permute.xlu0 %739
        %742 = vset.pattern.permute.xlu0 2
        %743 = vperm.xlu0 %742, %v397
        %v744 = vpop.permute.xlu0 %743
        %746 = vset.pattern.permute.xlu0 2
        %747 = vperm.xlu0 %746, %v398
        %v748 = vpop.permute.xlu0 %747
        %750 = vset.pattern.permute.xlu0 2
        %751 = vperm.xlu0 %750, %v399
        %v752 = vpop.permute.xlu0 %751
        %754 = vset.pattern.permute.xlu0 2
        %755 = vperm.xlu0 %754, %v400
        %v756 = vpop.permute.xlu0 %755
        %758 = vset.pattern.permute.xlu0 2
        %759 = vperm.xlu0 %758, %v401
        %v760 = vpop.permute.xlu0 %759
        %762 = vset.pattern.permute.xlu0 2
        %763 = vperm.xlu0 %762, %v402
        %v764 = vpop.permute.xlu0 %763
        %v766 = vadd.f32 %v718, %v736
        %v767 = vadd.f32 %v719, %v736
        %v768 = vadd.f32 %v720, %v740
        %v769 = vadd.f32 %v721, %v740
        %v770 = vadd.f32 %v722, %v744
        %v771 = vadd.f32 %v723, %v744
        %v772 = vadd.f32 %v724, %v748
        %v773 = vadd.f32 %v725, %v748
        %v774 = vadd.f32 %v726, %v752
        %v775 = vadd.f32 %v727, %v752
        %v776 = vadd.f32 %v728, %v756
        %v777 = vadd.f32 %v729, %v756
        %v778 = vadd.f32 %v730, %v760
        %v779 = vadd.f32 %v731, %v760
        %v780 = vadd.f32 %v732, %v764
        %v781 = vadd.f32 %v733, %v764
        %v782 = vmax.f32 %v766, 0.0
        %v783 = vmax.f32 %v767, 0.0
        %v784 = vmax.f32 %v768, 0.0
        %v785 = vmax.f32 %v769, 0.0
        %v786 = vmax.f32 %v770, 0.0
        %v787 = vmax.f32 %v771, 0.0
        %v788 = vmax.f32 %v772, 0.0
        %v789 = vmax.f32 %v773, 0.0
        %v790 = vmax.f32 %v774, 0.0
        %v791 = vmax.f32 %v775, 0.0
        %v792 = vmax.f32 %v776, 0.0
        %v793 = vmax.f32 %v777, 0.0
        %v794 = vmax.f32 %v778, 0.0
        %v795 = vmax.f32 %v779, 0.0
        %v796 = vmax.f32 %v780, 0.0
        %v797 = vmax.f32 %v781, 0.0
        %v798 = vpack.c.bf16 %v784, %v782
        %v799 = vpack.c.bf16 %v785, %v783
        %v800 = vpack.c.bf16 %v788, %v786
        %v801 = vpack.c.bf16 %v789, %v787
        %v802 = vpack.c.bf16 %v792, %v790
        %v803 = vpack.c.bf16 %v793, %v791
        %v804 = vpack.c.bf16 %v796, %v794
        %v805 = vpack.c.bf16 %v797, %v795
        %v806 = vld [vmem:[%s2] sm:$0xf]
        %v807 = vld [vmem:[%s2 + $0x4] sm:$0xf]
        %v808 = vld [vmem:[%s2 + $0x8] sm:$0xf]
        %v809 = vld [vmem:[%s2 + $0xc] sm:$0xf]
        %v810 = vld [vmem:[%s7] sm:$0xff]
        %v811 = vld [vmem:[%s7 + $0x8] sm:$0xff]
        %v812 = vld [vmem:[%s7 + $0x10] sm:$0xff]
        %v813 = vld [vmem:[%s7 + $0x18] sm:$0xff]
        %815 = vset.pattern.permute.xlu0 3
        %816 = vperm.xlu0 %815, %v810
        %v817 = vpop.permute.xlu0 %816
        %820 = vset.pattern.permute.xlu0 3
        %821 = vperm.xlu0 %820, %v811
        %v822 = vpop.permute.xlu0 %821
        %825 = vset.pattern.permute.xlu0 3
        %826 = vperm.xlu0 %825, %v812
        %v827 = vpop.permute.xlu0 %826
        %830 = vset.pattern.permute.xlu0 3
        %831 = vperm.xlu0 %830, %v813
        %v832 = vpop.permute.xlu0 %831
        %v838 = vunpack.c.l.b16 %v806
        %v839 = vunpack.c.l.b16 %v807
        %v840 = vunpack.c.l.b16 %v808
        %v841 = vunpack.c.l.b16 %v809
        %v842 = vpack.c.b16 %v839, %v838
        %v843 = vpack.c.b16 %v841, %v840
        %vm844 = vcmask 523264
        %v846 = vsel %vm844, %v842, 0
        %v849 = vsel %vm844, %v843, 0
        %851 = vmatpush.bf16.msra.mxu0 0
        %852 = vmatpush.bf16.msra.mxu0 0
        %853 = vmatpush.bf16.msra.mxu0 0
        %854 = vmatpush.bf16.msra.mxu0 0
        %855 = vmatpush.bf16.msra.mxu0 %v804
        %856 = vmatpush.bf16.msra.mxu0 %v802
        %857 = vmatpush.bf16.msra.mxu0 %v800
        %858 = vmatpush.bf16.msra.mxu0 %v798
        %859 = vmatmul.bf16.gmra.mxu0 %v846
        %v860 = vpop.f32.mrf.mxu0
        %v861 = vadd.f32 %v817, %v860
        %v862 = vpop.f32.mrf.mxu0
        %v863 = vadd.f32 %v822, %v862
        %864 = vmatmul.bf16.gmra.mxu0 %v849
        %v865 = vpop.f32.mrf.mxu0
        %v866 = vadd.f32 %v827, %v865
        %v867 = vpop.f32.mrf.mxu0
        %v868 = vadd.f32 %v832, %v867
        %869 = vdwg.mxu0
        %870 = vmatpush.bf16.msra.mxu0 0
        %871 = vmatpush.bf16.msra.mxu0 0
        %872 = vmatpush.bf16.msra.mxu0 0
        %873 = vmatpush.bf16.msra.mxu0 0
        %874 = vmatpush.bf16.msra.mxu0 %v805
        %875 = vmatpush.bf16.msra.mxu0 %v803
        %876 = vmatpush.bf16.msra.mxu0 %v801
        %877 = vmatpush.bf16.msra.mxu0 %v799
        %878 = vmatmul.bf16.gmra.mxu0 %v846
        %v879 = vpop.f32.mrf.mxu0
        %v880 = vadd.f32 %v817, %v879
        %v881 = vpop.f32.mrf.mxu0
        %v882 = vadd.f32 %v822, %v881
        %883 = vmatmul.bf16.gmra.mxu0 %v849
        %v884 = vpop.f32.mrf.mxu0
        %v885 = vadd.f32 %v827, %v884
        %v886 = vpop.f32.mrf.mxu0
        %v887 = vadd.f32 %v832, %v886
        %888 = vdwg.mxu0
        %v889 = vadd.f32 %v861, %v863
        %v890 = vadd.f32 %v889, %v866
        %v891 = vadd.f32 %v890, %v868
        %v892 = vrot.slane %v891, 4
        %v893 = vadd.f32 %v891, %v892
        %v894 = vrot.slane %v893, 2
        %v895 = vadd.f32 %v893, %v894
        %v896 = vrot.slane %v895, 1
        %v897 = vadd.f32 %v895, %v896
        %v898 = vadd.f32 %v880, %v882
        %v899 = vadd.f32 %v898, %v885
        %v900 = vadd.f32 %v899, %v887
        %v901 = vrot.slane %v900, 4
        %v902 = vadd.f32 %v900, %v901
        %v903 = vrot.slane %v902, 2
        %v904 = vadd.f32 %v902, %v903
        %v905 = vrot.slane %v904, 1
        %v906 = vadd.f32 %v904, %v905
        %v907 = vmul.f32 %v861, %v861
        %v908 = vmul.f32 %v880, %v880
        %v909 = vmul.f32 %v863, %v863
        %v910 = vmul.f32 %v882, %v882
        %v911 = vmul.f32 %v866, %v866
        %v912 = vmul.f32 %v885, %v885
        %v913 = vmul.f32 %v868, %v868
        %v914 = vmul.f32 %v887, %v887
        %v915 = vadd.f32 %v907, %v909
        %v916 = vadd.f32 %v915, %v911
        %v917 = vadd.f32 %v916, %v913
        %v918 = vrot.slane %v917, 4
        %v919 = vadd.f32 %v917, %v918
        %v920 = vrot.slane %v919, 2
        %v921 = vadd.f32 %v919, %v920
        %v922 = vrot.slane %v921, 1
        %v923 = vadd.f32 %v921, %v922
        %v924 = vadd.f32 %v908, %v910
        %v925 = vadd.f32 %v924, %v912
        %v926 = vadd.f32 %v925, %v914
        %v927 = vrot.slane %v926, 4
        %v928 = vadd.f32 %v926, %v927
        %v929 = vrot.slane %v928, 2
        %v930 = vadd.f32 %v928, %v929
        %v931 = vrot.slane %v930, 1
        %v932 = vadd.f32 %v930, %v931
        %v933 = vmul.f32 %v897, 0.03125
        %v934 = vmul.f32 %v906, 0.03125
        %v935 = vmul.f32 %v923, 0.03125
        %v936 = vmul.f32 %v932, 0.03125
        %v937 = vmul.f32 %v933, %v933
        %v938 = vmul.f32 %v934, %v934
        %v939 = vsub.f32 %v935, %v937
        %v940 = vsub.f32 %v936, %v938
        %v941 = vmax.f32 %v939, 0.0
        %v942 = vmax.f32 %v940, 0.0
        %v943 = vsub.f32 %v861, %v933
        %v944 = vsub.f32 %v880, %v934
        %v945 = vsub.f32 %v863, %v933
        %v946 = vsub.f32 %v882, %v934
        %v947 = vsub.f32 %v866, %v933
        %v948 = vsub.f32 %v885, %v934
        %v949 = vsub.f32 %v868, %v933
        %v950 = vsub.f32 %v887, %v934
        %v951 = vadd.f32 %v941, 1e-05
        %v952 = vadd.f32 %v942, 1e-05
        %v953 = vrsqrt.pop %v951
        %v954 = vmul.f32 %v953, %v951
        %v955 = vmul.f32 %v954, %v953
        %v956 = vmul.f32 0.5, %v955
        %v957 = vsub.f32 1.5, %v956
        %v958 = vmul.f32 %v953, %v957
        %vm959 = vweird.f32 %v951
        %vm960 = vweird.f32 %v953
        %vm961 = vmor %vm959, %vm960
        %v962 = vsel %vm961, %v953, %v958
        %v963 = vrsqrt.pop %v952
        %v964 = vmul.f32 %v963, %v952
        %v965 = vmul.f32 %v964, %v963
        %v966 = vmul.f32 0.5, %v965
        %v967 = vsub.f32 1.5, %v966
        %v968 = vmul.f32 %v963, %v967
        %vm969 = vweird.f32 %v952
        %vm970 = vweird.f32 %v963
        %vm971 = vmor %vm969, %vm970
        %v972 = vsel %vm971, %v963, %v968
        %v973 = vmul.f32 %v943, %v962
        %v974 = vmul.f32 %v944, %v972
        %v975 = vmul.f32 %v945, %v962
        %v976 = vmul.f32 %v946, %v972
        %v977 = vmul.f32 %v947, %v962
        %v978 = vmul.f32 %v948, %v972
        %v979 = vmul.f32 %v949, %v962
        %v980 = vmul.f32 %v950, %v972
        %981 = vset.pattern.permute.xlu0 4
        %982 = vperm.xlu0 %981, %v810
        %v983 = vpop.permute.xlu0 %982
        %985 = vset.pattern.permute.xlu0 4
        %986 = vperm.xlu0 %985, %v811
        %v987 = vpop.permute.xlu0 %986
        %989 = vset.pattern.permute.xlu0 4
        %990 = vperm.xlu0 %989, %v812
        %v991 = vpop.permute.xlu0 %990
        %993 = vset.pattern.permute.xlu0 4
        %994 = vperm.xlu0 %993, %v813
        %v995 = vpop.permute.xlu0 %994
        %v997 = vmul.f32 %v973, %v983
        %v998 = vmul.f32 %v974, %v983
        %v999 = vmul.f32 %v975, %v987
        %v1000 = vmul.f32 %v976, %v987
        %v1001 = vmul.f32 %v977, %v991
        %v1002 = vmul.f32 %v978, %v991
        %v1003 = vmul.f32 %v979, %v995
        %v1004 = vmul.f32 %v980, %v995
        %1005 = vset.pattern.permute.xlu0 5
        %1006 = vperm.xlu0 %1005, %v810
        %v1007 = vpop.permute.xlu0 %1006
        %1009 = vset.pattern.permute.xlu0 5
        %1010 = vperm.xlu0 %1009, %v811
        %v1011 = vpop.permute.xlu0 %1010
        %1013 = vset.pattern.permute.xlu0 5
        %1014 = vperm.xlu0 %1013, %v812
        %v1015 = vpop.permute.xlu0 %1014
        %1017 = vset.pattern.permute.xlu0 5
        %1018 = vperm.xlu0 %1017, %v813
        %v1019 = vpop.permute.xlu0 %1018
        %v1021 = vadd.f32 %v997, %v1007
        %v1022 = vadd.f32 %v998, %v1007
        %v1023 = vadd.f32 %v999, %v1011
        %v1024 = vadd.f32 %v1000, %v1011
        %v1025 = vadd.f32 %v1001, %v1015
        %v1026 = vadd.f32 %v1002, %v1015
        %v1027 = vadd.f32 %v1003, %v1019
        %v1028 = vadd.f32 %v1004, %v1019
        %v1029 = vmax.f32 %v1021, 0.0
        %v1030 = vmax.f32 %v1022, 0.0
        %v1031 = vmax.f32 %v1023, 0.0
        %v1032 = vmax.f32 %v1024, 0.0
        %v1033 = vmax.f32 %v1025, 0.0
        %v1034 = vmax.f32 %v1026, 0.0
        %v1035 = vmax.f32 %v1027, 0.0
        %v1036 = vmax.f32 %v1028, 0.0
        %v1037 = vpack.c.bf16 %v1031, %v1029
        %v1038 = vpack.c.bf16 %v1032, %v1030
        %v1039 = vpack.c.bf16 %v1035, %v1033
        %v1040 = vpack.c.bf16 %v1036, %v1034
        %v1041 = vld [vmem:[%s3] sm:$0xf]
        %v1042 = vld [vmem:[%s3 + $0x4] sm:$0xf]
        %v1043 = vld [vmem:[%s3 + $0x8] sm:$0xf]
        %v1044 = vld [vmem:[%s3 + $0xc] sm:$0xf]
        %v1045 = vld [vmem:[%s3 + $0x10] sm:$0xf]
        %v1046 = vld [vmem:[%s3 + $0x14] sm:$0xf]
        %v1047 = vld [vmem:[%s3 + $0x18] sm:$0xf]
        %v1048 = vld [vmem:[%s3 + $0x1c] sm:$0xf]
        %v1049 = vld [vmem:[%s4] sm:$0xf]
        %v1050 = vld [vmem:[%s4 + $0x4] sm:$0xf]
        %v1051 = vld [vmem:[%s4 + $0x8] sm:$0xf]
        %v1052 = vld [vmem:[%s4 + $0xc] sm:$0xf]
        %v1053 = vld [vmem:[%s4 + $0x10] sm:$0xf]
        %v1054 = vld [vmem:[%s4 + $0x14] sm:$0xf]
        %v1055 = vld [vmem:[%s4 + $0x18] sm:$0xf]
        %v1056 = vld [vmem:[%s4 + $0x1c] sm:$0xf]
        %v1065 = vunpack.c.l.b16 %v1049
        %v1066 = vunpack.c.l.b16 %v1050
        %v1067 = vunpack.c.l.b16 %v1051
        %v1068 = vunpack.c.l.b16 %v1052
        %v1069 = vunpack.c.l.b16 %v1053
        %v1070 = vunpack.c.l.b16 %v1054
        %v1071 = vunpack.c.l.b16 %v1055
        %v1072 = vunpack.c.l.b16 %v1056
        %v1073 = vpack.c.b16 %v1066, %v1065
        %v1074 = vpack.c.b16 %v1068, %v1067
        %v1075 = vpack.c.b16 %v1070, %v1069
        %v1076 = vpack.c.b16 %v1072, %v1071
        %v1078 = vsel %vm483, %v1073, 0
        %v1081 = vsel %vm483, %v1074, 0
        %v1084 = vsel %vm483, %v1075, 0
        %v1087 = vsel %vm483, %v1076, 0
        %1089 = vmatpush.bf16.msra.mxu0 0
        %1090 = vmatpush.bf16.msra.mxu0 0
        %1091 = vmatpush.bf16.msra.mxu0 0
        %1092 = vmatpush.bf16.msra.mxu0 0
        %1093 = vmatpush.bf16.msra.mxu0 0
        %1094 = vmatpush.bf16.msra.mxu0 0
        %1095 = vmatpush.bf16.msra.mxu0 %v477
        %1096 = vmatpush.bf16.msra.mxu0 %v475
        %1097 = vmatmul.bf16.gmra.mxu0 %v1078
        %v1098 = vpop.f32.mrf.mxu0
        %v1099 = vadd.f32 0.0, %v1098
        %v1100 = vpop.f32.mrf.mxu0
        %v1101 = vadd.f32 0.0, %v1100
        %1102 = vmatmul.bf16.gmra.mxu0 %v1081
        %v1103 = vpop.f32.mrf.mxu0
        %v1104 = vadd.f32 0.0, %v1103
        %v1105 = vpop.f32.mrf.mxu0
        %v1106 = vadd.f32 0.0, %v1105
        %1107 = vmatmul.bf16.gmra.mxu0 %v1084
        %v1108 = vpop.f32.mrf.mxu0
        %v1109 = vadd.f32 0.0, %v1108
        %v1110 = vpop.f32.mrf.mxu0
        %v1111 = vadd.f32 0.0, %v1110
        %1112 = vmatmul.bf16.gmra.mxu0 %v1087
        %v1113 = vpop.f32.mrf.mxu0
        %v1114 = vadd.f32 0.0, %v1113
        %v1115 = vpop.f32.mrf.mxu0
        %v1116 = vadd.f32 0.0, %v1115
        %1117 = vdwg.mxu0
        %1118 = vmatpush.bf16.msra.mxu0 0
        %1119 = vmatpush.bf16.msra.mxu0 0
        %1120 = vmatpush.bf16.msra.mxu0 0
        %1121 = vmatpush.bf16.msra.mxu0 0
        %1122 = vmatpush.bf16.msra.mxu0 0
        %1123 = vmatpush.bf16.msra.mxu0 0
        %1124 = vmatpush.bf16.msra.mxu0 %v478
        %1125 = vmatpush.bf16.msra.mxu0 %v476
        %1126 = vmatmul.bf16.gmra.mxu0 %v1078
        %v1127 = vpop.f32.mrf.mxu0
        %v1128 = vadd.f32 0.0, %v1127
        %v1129 = vpop.f32.mrf.mxu0
        %v1130 = vadd.f32 0.0, %v1129
        %1131 = vmatmul.bf16.gmra.mxu0 %v1081
        %v1132 = vpop.f32.mrf.mxu0
        %v1133 = vadd.f32 0.0, %v1132
        %v1134 = vpop.f32.mrf.mxu0
        %v1135 = vadd.f32 0.0, %v1134
        %1136 = vmatmul.bf16.gmra.mxu0 %v1084
        %v1137 = vpop.f32.mrf.mxu0
        %v1138 = vadd.f32 0.0, %v1137
        %v1139 = vpop.f32.mrf.mxu0
        %v1140 = vadd.f32 0.0, %v1139
        %1141 = vmatmul.bf16.gmra.mxu0 %v1087
        %v1142 = vpop.f32.mrf.mxu0
        %v1143 = vadd.f32 0.0, %v1142
        %v1144 = vpop.f32.mrf.mxu0
        %v1145 = vadd.f32 0.0, %v1144
        %1146 = vdwg.mxu0
        %v1155 = vunpack.c.l.b16 %v1041
        %v1156 = vunpack.c.l.b16 %v1042
        %v1157 = vunpack.c.l.b16 %v1043
        %v1158 = vunpack.c.l.b16 %v1044
        %v1159 = vunpack.c.l.b16 %v1045
        %v1160 = vunpack.c.l.b16 %v1046
        %v1161 = vunpack.c.l.b16 %v1047
        %v1162 = vunpack.c.l.b16 %v1048
        %v1163 = vpack.c.b16 %v1156, %v1155
        %v1164 = vpack.c.b16 %v1158, %v1157
        %v1165 = vpack.c.b16 %v1160, %v1159
        %v1166 = vpack.c.b16 %v1162, %v1161
        %v1168 = vsel %vm483, %v1163, 0
        %v1171 = vsel %vm483, %v1164, 0
        %v1174 = vsel %vm483, %v1165, 0
        %v1177 = vsel %vm483, %v1166, 0
        %1179 = vmatpush.bf16.msra.mxu0 0
        %1180 = vmatpush.bf16.msra.mxu0 0
        %1181 = vmatpush.bf16.msra.mxu0 0
        %1182 = vmatpush.bf16.msra.mxu0 0
        %1183 = vmatpush.bf16.msra.mxu0 0
        %1184 = vmatpush.bf16.msra.mxu0 0
        %1185 = vmatpush.bf16.msra.mxu0 %v1039
        %1186 = vmatpush.bf16.msra.mxu0 %v1037
        %1187 = vmatmul.bf16.gmra.mxu0 %v1168
        %v1188 = vpop.f32.mrf.mxu0
        %v1189 = vadd.f32 %v1099, %v1188
        %v1190 = vpop.f32.mrf.mxu0
        %v1191 = vadd.f32 %v1101, %v1190
        %1192 = vmatmul.bf16.gmra.mxu0 %v1171
        %v1193 = vpop.f32.mrf.mxu0
        %v1194 = vadd.f32 %v1104, %v1193
        %v1195 = vpop.f32.mrf.mxu0
        %v1196 = vadd.f32 %v1106, %v1195
        %1197 = vmatmul.bf16.gmra.mxu0 %v1174
        %v1198 = vpop.f32.mrf.mxu0
        %v1199 = vadd.f32 %v1109, %v1198
        %v1200 = vpop.f32.mrf.mxu0
        %v1201 = vadd.f32 %v1111, %v1200
        %1202 = vmatmul.bf16.gmra.mxu0 %v1177
        %v1203 = vpop.f32.mrf.mxu0
        %v1204 = vadd.f32 %v1114, %v1203
        %v1205 = vpop.f32.mrf.mxu0
        %v1206 = vadd.f32 %v1116, %v1205
        %1207 = vdwg.mxu0
        %1208 = vmatpush.bf16.msra.mxu0 0
        %1209 = vmatpush.bf16.msra.mxu0 0
        %1210 = vmatpush.bf16.msra.mxu0 0
        %1211 = vmatpush.bf16.msra.mxu0 0
        %1212 = vmatpush.bf16.msra.mxu0 0
        %1213 = vmatpush.bf16.msra.mxu0 0
        %1214 = vmatpush.bf16.msra.mxu0 %v1040
        %1215 = vmatpush.bf16.msra.mxu0 %v1038
        %1216 = vmatmul.bf16.gmra.mxu0 %v1168
        %v1217 = vpop.f32.mrf.mxu0
        %v1218 = vadd.f32 %v1128, %v1217
        %v1219 = vpop.f32.mrf.mxu0
        %v1220 = vadd.f32 %v1130, %v1219
        %1221 = vmatmul.bf16.gmra.mxu0 %v1171
        %v1222 = vpop.f32.mrf.mxu0
        %v1223 = vadd.f32 %v1133, %v1222
        %v1224 = vpop.f32.mrf.mxu0
        %v1225 = vadd.f32 %v1135, %v1224
        %1226 = vmatmul.bf16.gmra.mxu0 %v1174
        %v1227 = vpop.f32.mrf.mxu0
        %v1228 = vadd.f32 %v1138, %v1227
        %v1229 = vpop.f32.mrf.mxu0
        %v1230 = vadd.f32 %v1140, %v1229
        %1231 = vmatmul.bf16.gmra.mxu0 %v1177
        %v1232 = vpop.f32.mrf.mxu0
        %v1233 = vadd.f32 %v1143, %v1232
        %v1234 = vpop.f32.mrf.mxu0
        %v1235 = vadd.f32 %v1145, %v1234
        %1236 = vdwg.mxu0
        %1237 = vset.pattern.permute.xlu0 6
        %1238 = vperm.xlu0 %1237, %v395
        %v1239 = vpop.permute.xlu0 %1238
        %1241 = vset.pattern.permute.xlu0 6
        %1242 = vperm.xlu0 %1241, %v396
        %v1243 = vpop.permute.xlu0 %1242
        %1245 = vset.pattern.permute.xlu0 6
        %1246 = vperm.xlu0 %1245, %v397
        %v1247 = vpop.permute.xlu0 %1246
        %1249 = vset.pattern.permute.xlu0 6
        %1250 = vperm.xlu0 %1249, %v398
        %v1251 = vpop.permute.xlu0 %1250
        %1253 = vset.pattern.permute.xlu0 6
        %1254 = vperm.xlu0 %1253, %v399
        %v1255 = vpop.permute.xlu0 %1254
        %1257 = vset.pattern.permute.xlu0 6
        %1258 = vperm.xlu0 %1257, %v400
        %v1259 = vpop.permute.xlu0 %1258
        %1261 = vset.pattern.permute.xlu0 6
        %1262 = vperm.xlu0 %1261, %v401
        %v1263 = vpop.permute.xlu0 %1262
        %1265 = vset.pattern.permute.xlu0 6
        %1266 = vperm.xlu0 %1265, %v402
        %v1267 = vpop.permute.xlu0 %1266
        %v1269 = vadd.f32 %v1189, %v1239
        %v1270 = vadd.f32 %v1218, %v1239
        %v1271 = vadd.f32 %v1191, %v1243
        %v1272 = vadd.f32 %v1220, %v1243
        %v1273 = vadd.f32 %v1194, %v1247
        %v1274 = vadd.f32 %v1223, %v1247
        %v1275 = vadd.f32 %v1196, %v1251
        %v1276 = vadd.f32 %v1225, %v1251
        %v1277 = vadd.f32 %v1199, %v1255
        %v1278 = vadd.f32 %v1228, %v1255
        %v1279 = vadd.f32 %v1201, %v1259
        %v1280 = vadd.f32 %v1230, %v1259
        %v1281 = vadd.f32 %v1204, %v1263
        %v1282 = vadd.f32 %v1233, %v1263
        %v1283 = vadd.f32 %v1206, %v1267
        %v1284 = vadd.f32 %v1235, %v1267
        %v1285 = vadd.f32 %v1269, %v1271
        %v1286 = vadd.f32 %v1285, %v1273
        %v1287 = vadd.f32 %v1286, %v1275
        %v1288 = vadd.f32 %v1287, %v1277
        %v1289 = vadd.f32 %v1288, %v1279
        %v1290 = vadd.f32 %v1289, %v1281
        %v1291 = vadd.f32 %v1290, %v1283
        %v1292 = vrot.slane %v1291, 4
        %v1293 = vadd.f32 %v1291, %v1292
        %v1294 = vrot.slane %v1293, 2
        %v1295 = vadd.f32 %v1293, %v1294
        %v1296 = vrot.slane %v1295, 1
        %v1297 = vadd.f32 %v1295, %v1296
        %v1298 = vadd.f32 %v1270, %v1272
        %v1299 = vadd.f32 %v1298, %v1274
        %v1300 = vadd.f32 %v1299, %v1276
        %v1301 = vadd.f32 %v1300, %v1278
        %v1302 = vadd.f32 %v1301, %v1280
        %v1303 = vadd.f32 %v1302, %v1282
        %v1304 = vadd.f32 %v1303, %v1284
        %v1305 = vrot.slane %v1304, 4
        %v1306 = vadd.f32 %v1304, %v1305
        %v1307 = vrot.slane %v1306, 2
        %v1308 = vadd.f32 %v1306, %v1307
        %v1309 = vrot.slane %v1308, 1
        %v1310 = vadd.f32 %v1308, %v1309
        %v1311 = vmul.f32 %v1269, %v1269
        %v1312 = vmul.f32 %v1270, %v1270
        %v1313 = vmul.f32 %v1271, %v1271
        %v1314 = vmul.f32 %v1272, %v1272
        %v1315 = vmul.f32 %v1273, %v1273
        %v1316 = vmul.f32 %v1274, %v1274
        %v1317 = vmul.f32 %v1275, %v1275
        %v1318 = vmul.f32 %v1276, %v1276
        %v1319 = vmul.f32 %v1277, %v1277
        %v1320 = vmul.f32 %v1278, %v1278
        %v1321 = vmul.f32 %v1279, %v1279
        %v1322 = vmul.f32 %v1280, %v1280
        %v1323 = vmul.f32 %v1281, %v1281
        %v1324 = vmul.f32 %v1282, %v1282
        %v1325 = vmul.f32 %v1283, %v1283
        %v1326 = vmul.f32 %v1284, %v1284
        %v1327 = vadd.f32 %v1311, %v1313
        %v1328 = vadd.f32 %v1327, %v1315
        %v1329 = vadd.f32 %v1328, %v1317
        %v1330 = vadd.f32 %v1329, %v1319
        %v1331 = vadd.f32 %v1330, %v1321
        %v1332 = vadd.f32 %v1331, %v1323
        %v1333 = vadd.f32 %v1332, %v1325
        %v1334 = vrot.slane %v1333, 4
        %v1335 = vadd.f32 %v1333, %v1334
        %v1336 = vrot.slane %v1335, 2
        %v1337 = vadd.f32 %v1335, %v1336
        %v1338 = vrot.slane %v1337, 1
        %v1339 = vadd.f32 %v1337, %v1338
        %v1340 = vadd.f32 %v1312, %v1314
        %v1341 = vadd.f32 %v1340, %v1316
        %v1342 = vadd.f32 %v1341, %v1318
        %v1343 = vadd.f32 %v1342, %v1320
        %v1344 = vadd.f32 %v1343, %v1322
        %v1345 = vadd.f32 %v1344, %v1324
        %v1346 = vadd.f32 %v1345, %v1326
        %v1347 = vrot.slane %v1346, 4
        %v1348 = vadd.f32 %v1346, %v1347
        %v1349 = vrot.slane %v1348, 2
        %v1350 = vadd.f32 %v1348, %v1349
        %v1351 = vrot.slane %v1350, 1
        %v1352 = vadd.f32 %v1350, %v1351
        %v1353 = vmul.f32 %v1297, 0.015625
        %v1354 = vmul.f32 %v1310, 0.015625
        %v1355 = vmul.f32 %v1339, 0.015625
        %v1356 = vmul.f32 %v1352, 0.015625
        %v1357 = vmul.f32 %v1353, %v1353
        %v1358 = vmul.f32 %v1354, %v1354
        %v1359 = vsub.f32 %v1355, %v1357
        %v1360 = vsub.f32 %v1356, %v1358
        %v1361 = vmax.f32 %v1359, 0.0
        %v1362 = vmax.f32 %v1360, 0.0
        %v1363 = vsub.f32 %v1269, %v1353
        %v1364 = vsub.f32 %v1270, %v1354
        %v1365 = vsub.f32 %v1271, %v1353
        %v1366 = vsub.f32 %v1272, %v1354
        %v1367 = vsub.f32 %v1273, %v1353
        %v1368 = vsub.f32 %v1274, %v1354
        %v1369 = vsub.f32 %v1275, %v1353
        %v1370 = vsub.f32 %v1276, %v1354
        %v1371 = vsub.f32 %v1277, %v1353
        %v1372 = vsub.f32 %v1278, %v1354
        %v1373 = vsub.f32 %v1279, %v1353
        %v1374 = vsub.f32 %v1280, %v1354
        %v1375 = vsub.f32 %v1281, %v1353
        %v1376 = vsub.f32 %v1282, %v1354
        %v1377 = vsub.f32 %v1283, %v1353
        %v1378 = vsub.f32 %v1284, %v1354
        %v1379 = vadd.f32 %v1361, 1e-05
        %v1380 = vadd.f32 %v1362, 1e-05
        %v1381 = vrsqrt.pop %v1379
        %v1382 = vmul.f32 %v1381, %v1379
        %v1383 = vmul.f32 %v1382, %v1381
        %v1384 = vmul.f32 0.5, %v1383
        %v1385 = vsub.f32 1.5, %v1384
        %v1386 = vmul.f32 %v1381, %v1385
        %vm1387 = vweird.f32 %v1379
        %vm1388 = vweird.f32 %v1381
        %vm1389 = vmor %vm1387, %vm1388
        %v1390 = vsel %vm1389, %v1381, %v1386
        %v1391 = vrsqrt.pop %v1380
        %v1392 = vmul.f32 %v1391, %v1380
        %v1393 = vmul.f32 %v1392, %v1391
        %v1394 = vmul.f32 0.5, %v1393
        %v1395 = vsub.f32 1.5, %v1394
        %v1396 = vmul.f32 %v1391, %v1395
        %vm1397 = vweird.f32 %v1380
        %vm1398 = vweird.f32 %v1391
        %vm1399 = vmor %vm1397, %vm1398
        %v1400 = vsel %vm1399, %v1391, %v1396
        %v1401 = vmul.f32 %v1363, %v1390
        %v1402 = vmul.f32 %v1364, %v1400
        %v1403 = vmul.f32 %v1365, %v1390
        %v1404 = vmul.f32 %v1366, %v1400
        %v1405 = vmul.f32 %v1367, %v1390
        %v1406 = vmul.f32 %v1368, %v1400
        %v1407 = vmul.f32 %v1369, %v1390
        %v1408 = vmul.f32 %v1370, %v1400
        %v1409 = vmul.f32 %v1371, %v1390
        %v1410 = vmul.f32 %v1372, %v1400
        %v1411 = vmul.f32 %v1373, %v1390
        %v1412 = vmul.f32 %v1374, %v1400
        %v1413 = vmul.f32 %v1375, %v1390
        %v1414 = vmul.f32 %v1376, %v1400
        %v1415 = vmul.f32 %v1377, %v1390
        %v1416 = vmul.f32 %v1378, %v1400
        %1417 = vset.pattern.permute.xlu0 7
        %1418 = vperm.xlu0 %1417, %v395
        %v1419 = vpop.permute.xlu0 %1418
        %1421 = vset.pattern.permute.xlu0 7
        %1422 = vperm.xlu0 %1421, %v396
        %v1423 = vpop.permute.xlu0 %1422
        %1425 = vset.pattern.permute.xlu0 7
        %1426 = vperm.xlu0 %1425, %v397
        %v1427 = vpop.permute.xlu0 %1426
        %1429 = vset.pattern.permute.xlu0 7
        %1430 = vperm.xlu0 %1429, %v398
        %v1431 = vpop.permute.xlu0 %1430
        %1433 = vset.pattern.permute.xlu0 7
        %1434 = vperm.xlu0 %1433, %v399
        %v1435 = vpop.permute.xlu0 %1434
        %1437 = vset.pattern.permute.xlu0 7
        %1438 = vperm.xlu0 %1437, %v400
        %v1439 = vpop.permute.xlu0 %1438
        %1441 = vset.pattern.permute.xlu0 7
        %1442 = vperm.xlu0 %1441, %v401
        %v1443 = vpop.permute.xlu0 %1442
        %1445 = vset.pattern.permute.xlu0 7
        %1446 = vperm.xlu0 %1445, %v402
        %v1447 = vpop.permute.xlu0 %1446
        %v1449 = vmul.f32 %v1401, %v1419
        %v1450 = vmul.f32 %v1402, %v1419
        %v1451 = vmul.f32 %v1403, %v1423
        %v1452 = vmul.f32 %v1404, %v1423
        %v1453 = vmul.f32 %v1405, %v1427
        %v1454 = vmul.f32 %v1406, %v1427
        %v1455 = vmul.f32 %v1407, %v1431
        %v1456 = vmul.f32 %v1408, %v1431
        %v1457 = vmul.f32 %v1409, %v1435
        %v1458 = vmul.f32 %v1410, %v1435
        %v1459 = vmul.f32 %v1411, %v1439
        %v1460 = vmul.f32 %v1412, %v1439
        %v1461 = vmul.f32 %v1413, %v1443
        %v1462 = vmul.f32 %v1414, %v1443
        %v1463 = vmul.f32 %v1415, %v1447
        %v1464 = vmul.f32 %v1416, %v1447
        %1465 = vset.pattern.permute.xlu0 8
        %1466 = vperm.xlu0 %1465, %v395
        %v1467 = vpop.permute.xlu0 %1466
        %1469 = vset.pattern.permute.xlu0 8
        %1470 = vperm.xlu0 %1469, %v396
        %v1471 = vpop.permute.xlu0 %1470
        %1473 = vset.pattern.permute.xlu0 8
        %1474 = vperm.xlu0 %1473, %v397
        %v1475 = vpop.permute.xlu0 %1474
        %1477 = vset.pattern.permute.xlu0 8
        %1478 = vperm.xlu0 %1477, %v398
        %v1479 = vpop.permute.xlu0 %1478
        %1481 = vset.pattern.permute.xlu0 8
        %1482 = vperm.xlu0 %1481, %v399
        %v1483 = vpop.permute.xlu0 %1482
        %1485 = vset.pattern.permute.xlu0 8
        %1486 = vperm.xlu0 %1485, %v400
        %v1487 = vpop.permute.xlu0 %1486
        %1489 = vset.pattern.permute.xlu0 8
        %1490 = vperm.xlu0 %1489, %v401
        %v1491 = vpop.permute.xlu0 %1490
        %1493 = vset.pattern.permute.xlu0 8
        %1494 = vperm.xlu0 %1493, %v402
        %v1495 = vpop.permute.xlu0 %1494
        %v1497 = vadd.f32 %v1449, %v1467
        %v1498 = vadd.f32 %v1450, %v1467
        %v1499 = vadd.f32 %v1451, %v1471
        %v1500 = vadd.f32 %v1452, %v1471
        %v1501 = vadd.f32 %v1453, %v1475
        %v1502 = vadd.f32 %v1454, %v1475
        %v1503 = vadd.f32 %v1455, %v1479
        %v1504 = vadd.f32 %v1456, %v1479
        %v1505 = vadd.f32 %v1457, %v1483
        %v1506 = vadd.f32 %v1458, %v1483
        %v1507 = vadd.f32 %v1459, %v1487
        %v1508 = vadd.f32 %v1460, %v1487
        %v1509 = vadd.f32 %v1461, %v1491
        %v1510 = vadd.f32 %v1462, %v1491
        %v1511 = vadd.f32 %v1463, %v1495
        %v1512 = vadd.f32 %v1464, %v1495
        %v1513 = vmax.f32 %v1497, 0.0
        %v1514 = vmax.f32 %v1498, 0.0
        %v1515 = vmax.f32 %v1499, 0.0
        %v1516 = vmax.f32 %v1500, 0.0
        %v1517 = vmax.f32 %v1501, 0.0
        %v1518 = vmax.f32 %v1502, 0.0
        %v1519 = vmax.f32 %v1503, 0.0
        %v1520 = vmax.f32 %v1504, 0.0
        %v1521 = vmax.f32 %v1505, 0.0
        %v1522 = vmax.f32 %v1506, 0.0
        %v1523 = vmax.f32 %v1507, 0.0
        %v1524 = vmax.f32 %v1508, 0.0
        %v1525 = vmax.f32 %v1509, 0.0
        %v1526 = vmax.f32 %v1510, 0.0
        %v1527 = vmax.f32 %v1511, 0.0
        %v1528 = vmax.f32 %v1512, 0.0
        %v1529 = vpack.c.bf16 %v1515, %v1513
        %v1530 = vpack.c.bf16 %v1516, %v1514
        %v1531 = vpack.c.bf16 %v1519, %v1517
        %v1532 = vpack.c.bf16 %v1520, %v1518
        %v1533 = vpack.c.bf16 %v1523, %v1521
        %v1534 = vpack.c.bf16 %v1524, %v1522
        %v1535 = vpack.c.bf16 %v1527, %v1525
        %v1536 = vpack.c.bf16 %v1528, %v1526
        %v1537 = vld [vmem:[%s5] sm:$0xf]
        %v1538 = vld [vmem:[%s5 + $0x4] sm:$0xf]
        %v1539 = vld [vmem:[%s5 + $0x8] sm:$0xf]
        %v1540 = vld [vmem:[%s5 + $0xc] sm:$0xf]
        %v1541 = vld [vmem:[%s5 + $0x10] sm:$0xf]
        %v1542 = vld [vmem:[%s5 + $0x14] sm:$0xf]
        %v1543 = vld [vmem:[%s5 + $0x18] sm:$0xf]
        %v1544 = vld [vmem:[%s5 + $0x1c] sm:$0xf]
        %1545 = vset.pattern.permute.xlu0 9
        %1546 = vperm.xlu0 %1545, %v395
        %v1547 = vpop.permute.xlu0 %1546
        %1549 = vset.pattern.permute.xlu0 9
        %1550 = vperm.xlu0 %1549, %v396
        %v1551 = vpop.permute.xlu0 %1550
        %1553 = vset.pattern.permute.xlu0 9
        %1554 = vperm.xlu0 %1553, %v397
        %v1555 = vpop.permute.xlu0 %1554
        %1557 = vset.pattern.permute.xlu0 9
        %1558 = vperm.xlu0 %1557, %v398
        %v1559 = vpop.permute.xlu0 %1558
        %1561 = vset.pattern.permute.xlu0 9
        %1562 = vperm.xlu0 %1561, %v399
        %v1563 = vpop.permute.xlu0 %1562
        %1565 = vset.pattern.permute.xlu0 9
        %1566 = vperm.xlu0 %1565, %v400
        %v1567 = vpop.permute.xlu0 %1566
        %1569 = vset.pattern.permute.xlu0 9
        %1570 = vperm.xlu0 %1569, %v401
        %v1571 = vpop.permute.xlu0 %1570
        %1573 = vset.pattern.permute.xlu0 9
        %1574 = vperm.xlu0 %1573, %v402
        %v1575 = vpop.permute.xlu0 %1574
        %v1585 = vunpack.c.l.b16 %v1537
        %v1586 = vunpack.c.l.b16 %v1538
        %v1587 = vunpack.c.l.b16 %v1539
        %v1588 = vunpack.c.l.b16 %v1540
        %v1589 = vunpack.c.l.b16 %v1541
        %v1590 = vunpack.c.l.b16 %v1542
        %v1591 = vunpack.c.l.b16 %v1543
        %v1592 = vunpack.c.l.b16 %v1544
        %v1593 = vpack.c.b16 %v1586, %v1585
        %v1594 = vpack.c.b16 %v1588, %v1587
        %v1595 = vpack.c.b16 %v1590, %v1589
        %v1596 = vpack.c.b16 %v1592, %v1591
        %v1598 = vsel %vm844, %v1593, 0
        %v1601 = vsel %vm844, %v1594, 0
        %v1604 = vsel %vm844, %v1595, 0
        %v1607 = vsel %vm844, %v1596, 0
        %1609 = vmatpush.bf16.msra.mxu0 0
        %1610 = vmatpush.bf16.msra.mxu0 0
        %1611 = vmatpush.bf16.msra.mxu0 0
        %1612 = vmatpush.bf16.msra.mxu0 0
        %1613 = vmatpush.bf16.msra.mxu0 %v1535
        %1614 = vmatpush.bf16.msra.mxu0 %v1533
        %1615 = vmatpush.bf16.msra.mxu0 %v1531
        %1616 = vmatpush.bf16.msra.mxu0 %v1529
        %1617 = vmatmul.bf16.gmra.mxu0 %v1598
        %v1618 = vpop.f32.mrf.mxu0
        %v1619 = vadd.f32 %v1547, %v1618
        %v1620 = vpop.f32.mrf.mxu0
        %v1621 = vadd.f32 %v1551, %v1620
        %1622 = vmatmul.bf16.gmra.mxu0 %v1601
        %v1623 = vpop.f32.mrf.mxu0
        %v1624 = vadd.f32 %v1555, %v1623
        %v1625 = vpop.f32.mrf.mxu0
        %v1626 = vadd.f32 %v1559, %v1625
        %1627 = vmatmul.bf16.gmra.mxu0 %v1604
        %v1628 = vpop.f32.mrf.mxu0
        %v1629 = vadd.f32 %v1563, %v1628
        %v1630 = vpop.f32.mrf.mxu0
        %v1631 = vadd.f32 %v1567, %v1630
        %1632 = vmatmul.bf16.gmra.mxu0 %v1607
        %v1633 = vpop.f32.mrf.mxu0
        %v1634 = vadd.f32 %v1571, %v1633
        %v1635 = vpop.f32.mrf.mxu0
        %v1636 = vadd.f32 %v1575, %v1635
        %1637 = vdwg.mxu0
        %1638 = vmatpush.bf16.msra.mxu0 0
        %1639 = vmatpush.bf16.msra.mxu0 0
        %1640 = vmatpush.bf16.msra.mxu0 0
        %1641 = vmatpush.bf16.msra.mxu0 0
        %1642 = vmatpush.bf16.msra.mxu0 %v1536
        %1643 = vmatpush.bf16.msra.mxu0 %v1534
        %1644 = vmatpush.bf16.msra.mxu0 %v1532
        %1645 = vmatpush.bf16.msra.mxu0 %v1530
        %1646 = vmatmul.bf16.gmra.mxu0 %v1598
        %v1647 = vpop.f32.mrf.mxu0
        %v1648 = vadd.f32 %v1547, %v1647
        %v1649 = vpop.f32.mrf.mxu0
        %v1650 = vadd.f32 %v1551, %v1649
        %1651 = vmatmul.bf16.gmra.mxu0 %v1601
        %v1652 = vpop.f32.mrf.mxu0
        %v1653 = vadd.f32 %v1555, %v1652
        %v1654 = vpop.f32.mrf.mxu0
        %v1655 = vadd.f32 %v1559, %v1654
        %1656 = vmatmul.bf16.gmra.mxu0 %v1604
        %v1657 = vpop.f32.mrf.mxu0
        %v1658 = vadd.f32 %v1563, %v1657
        %v1659 = vpop.f32.mrf.mxu0
        %v1660 = vadd.f32 %v1567, %v1659
        %1661 = vmatmul.bf16.gmra.mxu0 %v1607
        %v1662 = vpop.f32.mrf.mxu0
        %v1663 = vadd.f32 %v1571, %v1662
        %v1664 = vpop.f32.mrf.mxu0
        %v1665 = vadd.f32 %v1575, %v1664
        %1666 = vdwg.mxu0
        %v1667 = vadd.f32 %v1619, %v1621
        %v1668 = vadd.f32 %v1667, %v1624
        %v1669 = vadd.f32 %v1668, %v1626
        %v1670 = vadd.f32 %v1669, %v1629
        %v1671 = vadd.f32 %v1670, %v1631
        %v1672 = vadd.f32 %v1671, %v1634
        %v1673 = vadd.f32 %v1672, %v1636
        %v1674 = vrot.slane %v1673, 4
        %v1675 = vadd.f32 %v1673, %v1674
        %v1676 = vrot.slane %v1675, 2
        %v1677 = vadd.f32 %v1675, %v1676
        %v1678 = vrot.slane %v1677, 1
        %v1679 = vadd.f32 %v1677, %v1678
        %v1680 = vadd.f32 %v1648, %v1650
        %v1681 = vadd.f32 %v1680, %v1653
        %v1682 = vadd.f32 %v1681, %v1655
        %v1683 = vadd.f32 %v1682, %v1658
        %v1684 = vadd.f32 %v1683, %v1660
        %v1685 = vadd.f32 %v1684, %v1663
        %v1686 = vadd.f32 %v1685, %v1665
        %v1687 = vrot.slane %v1686, 4
        %v1688 = vadd.f32 %v1686, %v1687
        %v1689 = vrot.slane %v1688, 2
        %v1690 = vadd.f32 %v1688, %v1689
        %v1691 = vrot.slane %v1690, 1
        %v1692 = vadd.f32 %v1690, %v1691
        %v1693 = vmul.f32 %v1619, %v1619
        %v1694 = vmul.f32 %v1648, %v1648
        %v1695 = vmul.f32 %v1621, %v1621
        %v1696 = vmul.f32 %v1650, %v1650
        %v1697 = vmul.f32 %v1624, %v1624
        %v1698 = vmul.f32 %v1653, %v1653
        %v1699 = vmul.f32 %v1626, %v1626
        %v1700 = vmul.f32 %v1655, %v1655
        %v1701 = vmul.f32 %v1629, %v1629
        %v1702 = vmul.f32 %v1658, %v1658
        %v1703 = vmul.f32 %v1631, %v1631
        %v1704 = vmul.f32 %v1660, %v1660
        %v1705 = vmul.f32 %v1634, %v1634
        %v1706 = vmul.f32 %v1663, %v1663
        %v1707 = vmul.f32 %v1636, %v1636
        %v1708 = vmul.f32 %v1665, %v1665
        %v1709 = vadd.f32 %v1693, %v1695
        %v1710 = vadd.f32 %v1709, %v1697
        %v1711 = vadd.f32 %v1710, %v1699
        %v1712 = vadd.f32 %v1711, %v1701
        %v1713 = vadd.f32 %v1712, %v1703
        %v1714 = vadd.f32 %v1713, %v1705
        %v1715 = vadd.f32 %v1714, %v1707
        %v1716 = vrot.slane %v1715, 4
        %v1717 = vadd.f32 %v1715, %v1716
        %v1718 = vrot.slane %v1717, 2
        %v1719 = vadd.f32 %v1717, %v1718
        %v1720 = vrot.slane %v1719, 1
        %v1721 = vadd.f32 %v1719, %v1720
        %v1722 = vadd.f32 %v1694, %v1696
        %v1723 = vadd.f32 %v1722, %v1698
        %v1724 = vadd.f32 %v1723, %v1700
        %v1725 = vadd.f32 %v1724, %v1702
        %v1726 = vadd.f32 %v1725, %v1704
        %v1727 = vadd.f32 %v1726, %v1706
        %v1728 = vadd.f32 %v1727, %v1708
        %v1729 = vrot.slane %v1728, 4
        %v1730 = vadd.f32 %v1728, %v1729
        %v1731 = vrot.slane %v1730, 2
        %v1732 = vadd.f32 %v1730, %v1731
        %v1733 = vrot.slane %v1732, 1
        %v1734 = vadd.f32 %v1732, %v1733
        %v1735 = vmul.f32 %v1679, 0.015625
        %v1736 = vmul.f32 %v1692, 0.015625
        %v1737 = vmul.f32 %v1721, 0.015625
        %v1738 = vmul.f32 %v1734, 0.015625
        %v1739 = vmul.f32 %v1735, %v1735
        %v1740 = vmul.f32 %v1736, %v1736
        %v1741 = vsub.f32 %v1737, %v1739
        %v1742 = vsub.f32 %v1738, %v1740
        %v1743 = vmax.f32 %v1741, 0.0
        %v1744 = vmax.f32 %v1742, 0.0
        %v1745 = vsub.f32 %v1619, %v1735
        %v1746 = vsub.f32 %v1648, %v1736
        %v1747 = vsub.f32 %v1621, %v1735
        %v1748 = vsub.f32 %v1650, %v1736
        %v1749 = vsub.f32 %v1624, %v1735
        %v1750 = vsub.f32 %v1653, %v1736
        %v1751 = vsub.f32 %v1626, %v1735
        %v1752 = vsub.f32 %v1655, %v1736
        %v1753 = vsub.f32 %v1629, %v1735
        %v1754 = vsub.f32 %v1658, %v1736
        %v1755 = vsub.f32 %v1631, %v1735
        %v1756 = vsub.f32 %v1660, %v1736
        %v1757 = vsub.f32 %v1634, %v1735
        %v1758 = vsub.f32 %v1663, %v1736
        %v1759 = vsub.f32 %v1636, %v1735
        %v1760 = vsub.f32 %v1665, %v1736
        %v1761 = vadd.f32 %v1743, 1e-05
        %v1762 = vadd.f32 %v1744, 1e-05
        %v1763 = vrsqrt.pop %v1761
        %v1764 = vmul.f32 %v1763, %v1761
        %v1765 = vmul.f32 %v1764, %v1763
        %v1766 = vmul.f32 0.5, %v1765
        %v1767 = vsub.f32 1.5, %v1766
        %v1768 = vmul.f32 %v1763, %v1767
        %vm1769 = vweird.f32 %v1761
        %vm1770 = vweird.f32 %v1763
        %vm1771 = vmor %vm1769, %vm1770
        %v1772 = vsel %vm1771, %v1763, %v1768
        %v1773 = vrsqrt.pop %v1762
        %v1774 = vmul.f32 %v1773, %v1762
        %v1775 = vmul.f32 %v1774, %v1773
        %v1776 = vmul.f32 0.5, %v1775
        %v1777 = vsub.f32 1.5, %v1776
        %v1778 = vmul.f32 %v1773, %v1777
        %vm1779 = vweird.f32 %v1762
        %vm1780 = vweird.f32 %v1773
        %vm1781 = vmor %vm1779, %vm1780
        %v1782 = vsel %vm1781, %v1773, %v1778
        %v1783 = vmul.f32 %v1745, %v1772
        %v1784 = vmul.f32 %v1746, %v1782
        %v1785 = vmul.f32 %v1747, %v1772
        %v1786 = vmul.f32 %v1748, %v1782
        %v1787 = vmul.f32 %v1749, %v1772
        %v1788 = vmul.f32 %v1750, %v1782
        %v1789 = vmul.f32 %v1751, %v1772
        %v1790 = vmul.f32 %v1752, %v1782
        %v1791 = vmul.f32 %v1753, %v1772
        %v1792 = vmul.f32 %v1754, %v1782
        %v1793 = vmul.f32 %v1755, %v1772
        %v1794 = vmul.f32 %v1756, %v1782
        %v1795 = vmul.f32 %v1757, %v1772
        %v1796 = vmul.f32 %v1758, %v1782
        %v1797 = vmul.f32 %v1759, %v1772
        %v1798 = vmul.f32 %v1760, %v1782
        %1799 = vset.pattern.permute.xlu0 10
        %1800 = vperm.xlu0 %1799, %v395
        %v1801 = vpop.permute.xlu0 %1800
        %1803 = vset.pattern.permute.xlu0 10
        %1804 = vperm.xlu0 %1803, %v396
        %v1805 = vpop.permute.xlu0 %1804
        %1807 = vset.pattern.permute.xlu0 10
        %1808 = vperm.xlu0 %1807, %v397
        %v1809 = vpop.permute.xlu0 %1808
        %1811 = vset.pattern.permute.xlu0 10
        %1812 = vperm.xlu0 %1811, %v398
        %v1813 = vpop.permute.xlu0 %1812
        %1815 = vset.pattern.permute.xlu0 10
        %1816 = vperm.xlu0 %1815, %v399
        %v1817 = vpop.permute.xlu0 %1816
        %1819 = vset.pattern.permute.xlu0 10
        %1820 = vperm.xlu0 %1819, %v400
        %v1821 = vpop.permute.xlu0 %1820
        %1823 = vset.pattern.permute.xlu0 10
        %1824 = vperm.xlu0 %1823, %v401
        %v1825 = vpop.permute.xlu0 %1824
        %1827 = vset.pattern.permute.xlu0 10
        %1828 = vperm.xlu0 %1827, %v402
        %v1829 = vpop.permute.xlu0 %1828
        %v1831 = vmul.f32 %v1783, %v1801
        %v1832 = vmul.f32 %v1784, %v1801
        %v1833 = vmul.f32 %v1785, %v1805
        %v1834 = vmul.f32 %v1786, %v1805
        %v1835 = vmul.f32 %v1787, %v1809
        %v1836 = vmul.f32 %v1788, %v1809
        %v1837 = vmul.f32 %v1789, %v1813
        %v1838 = vmul.f32 %v1790, %v1813
        %v1839 = vmul.f32 %v1791, %v1817
        %v1840 = vmul.f32 %v1792, %v1817
        %v1841 = vmul.f32 %v1793, %v1821
        %v1842 = vmul.f32 %v1794, %v1821
        %v1843 = vmul.f32 %v1795, %v1825
        %v1844 = vmul.f32 %v1796, %v1825
        %v1845 = vmul.f32 %v1797, %v1829
        %v1846 = vmul.f32 %v1798, %v1829
        %1847 = vset.pattern.permute.xlu0 11
        %1848 = vperm.xlu0 %1847, %v395
        %v1849 = vpop.permute.xlu0 %1848
        %1851 = vset.pattern.permute.xlu0 11
        %1852 = vperm.xlu0 %1851, %v396
        %v1853 = vpop.permute.xlu0 %1852
        %1855 = vset.pattern.permute.xlu0 11
        %1856 = vperm.xlu0 %1855, %v397
        %v1857 = vpop.permute.xlu0 %1856
        %1859 = vset.pattern.permute.xlu0 11
        %1860 = vperm.xlu0 %1859, %v398
        %v1861 = vpop.permute.xlu0 %1860
        %1863 = vset.pattern.permute.xlu0 11
        %1864 = vperm.xlu0 %1863, %v399
        %v1865 = vpop.permute.xlu0 %1864
        %1867 = vset.pattern.permute.xlu0 11
        %1868 = vperm.xlu0 %1867, %v400
        %v1869 = vpop.permute.xlu0 %1868
        %1871 = vset.pattern.permute.xlu0 11
        %1872 = vperm.xlu0 %1871, %v401
        %v1873 = vpop.permute.xlu0 %1872
        %1875 = vset.pattern.permute.xlu0 11
        %1876 = vperm.xlu0 %1875, %v402
        %v1877 = vpop.permute.xlu0 %1876
        %v1879 = vadd.f32 %v1831, %v1849
        %v1880 = vadd.f32 %v1832, %v1849
        %v1881 = vadd.f32 %v1833, %v1853
        %v1882 = vadd.f32 %v1834, %v1853
        %v1883 = vadd.f32 %v1835, %v1857
        %v1884 = vadd.f32 %v1836, %v1857
        %v1885 = vadd.f32 %v1837, %v1861
        %v1886 = vadd.f32 %v1838, %v1861
        %v1887 = vadd.f32 %v1839, %v1865
        %v1888 = vadd.f32 %v1840, %v1865
        %v1889 = vadd.f32 %v1841, %v1869
        %v1890 = vadd.f32 %v1842, %v1869
        %v1891 = vadd.f32 %v1843, %v1873
        %v1892 = vadd.f32 %v1844, %v1873
        %v1893 = vadd.f32 %v1845, %v1877
        %v1894 = vadd.f32 %v1846, %v1877
        %v1895 = vmax.f32 %v1879, 0.0
        %v1896 = vmax.f32 %v1880, 0.0
        %v1897 = vmax.f32 %v1881, 0.0
        %v1898 = vmax.f32 %v1882, 0.0
        %v1899 = vmax.f32 %v1883, 0.0
        %v1900 = vmax.f32 %v1884, 0.0
        %v1901 = vmax.f32 %v1885, 0.0
        %v1902 = vmax.f32 %v1886, 0.0
        %v1903 = vmax.f32 %v1887, 0.0
        %v1904 = vmax.f32 %v1888, 0.0
        %v1905 = vmax.f32 %v1889, 0.0
        %v1906 = vmax.f32 %v1890, 0.0
        %v1907 = vmax.f32 %v1891, 0.0
        %v1908 = vmax.f32 %v1892, 0.0
        %v1909 = vmax.f32 %v1893, 0.0
        %v1910 = vmax.f32 %v1894, 0.0
        %v1911 = vpack.c.bf16 %v1897, %v1895
        %v1912 = vpack.c.bf16 %v1898, %v1896
        %v1913 = vpack.c.bf16 %v1901, %v1899
        %v1914 = vpack.c.bf16 %v1902, %v1900
        %v1915 = vpack.c.bf16 %v1905, %v1903
        %v1916 = vpack.c.bf16 %v1906, %v1904
        %v1917 = vpack.c.bf16 %v1909, %v1907
        %v1918 = vpack.c.bf16 %v1910, %v1908
        %v1919 = vld [vmem:[%s6] sm:$0xf]
        %v1921 = vsel %vm844, %v1919, 0
        %1923 = vmatpush.bf16.msra.mxu0 0
        %1924 = vmatpush.bf16.msra.mxu0 0
        %1925 = vmatpush.bf16.msra.mxu0 0
        %1926 = vmatpush.bf16.msra.mxu0 0
        %1927 = vmatpush.bf16.msra.mxu0 %v1917
        %1928 = vmatpush.bf16.msra.mxu0 %v1915
        %1929 = vmatpush.bf16.msra.mxu0 %v1913
        %1930 = vmatpush.bf16.msra.mxu0 %v1911
        %1931 = vmatmul.bf16.gmra.mxu0 %v1921
        %v1932 = vpop.f32.mrf.mxu0
        %v1933 = vadd.f32 0.0, %v1932
        %v1934 = vpop.f32.mrf.mxu0
        %1935 = vdwg.mxu0
        %1936 = vmatpush.bf16.msra.mxu0 0
        %1937 = vmatpush.bf16.msra.mxu0 0
        %1938 = vmatpush.bf16.msra.mxu0 0
        %1939 = vmatpush.bf16.msra.mxu0 0
        %1940 = vmatpush.bf16.msra.mxu0 %v1918
        %1941 = vmatpush.bf16.msra.mxu0 %v1916
        %1942 = vmatpush.bf16.msra.mxu0 %v1914
        %1943 = vmatpush.bf16.msra.mxu0 %v1912
        %1944 = vmatmul.bf16.gmra.mxu0 %v1921
        %v1945 = vpop.f32.mrf.mxu0
        %v1946 = vadd.f32 0.0, %v1945
        %v1947 = vpop.f32.mrf.mxu0
        %1948 = vdwg.mxu0
        %s1949 = sld [smem:[#allocation2]]
        %v1950 = vstv %s1949
        %v1951 = vadd.f32 %v1933, %v1950
        %v1952 = vadd.f32 %v1946, %v1950
        %v1953 = vtanh.pop %v1951
        %v1954 = vtanh.pop %v1952
        %v1957 = vrot.slane %v1954, 7
        %vm1958 = vcmask 1040384
        %v1959 = vsel %vm1958, %v1953, %v1957
        %v1961 = vlaneseq
        %vm1962 = vcmp.ge.s32.totalorder %v1961, 0
        %vm1963 = vcmp.lt.s32.totalorder %v1961, 256
        %vm1964 = vmand %vm1962, %vm1963
        %1965 = vst.msk [vmem:[%s380] sm:$0x3] %vm1964, %v1959
        %s1966 = smul.u32 2, %s21
        %p1967 = scmp.lt.s32.totalorder %s1966, 3
        %s1968 = scalar_select %p1967, %s1966, 3
        %s1969 = scalar_lea.vmem %s9, %s1968
        // Predicated region
        $region95: #{decoder_forward.1} parent=89 // pred_check
          %p1970 = pneg %p233
        $region96: #{decoder_forward.1} parent=89 // pred_check_branch
          %1972 = sbr.rel (%p1970) target = $region98
        $region97: #{decoder_forward.1} parent=89 // pred_region
          %s1973 = smul.u32 2, %s21
        $region98: #{decoder_forward.1} parent=89 // pred_fallthru
          _
      $region90: #{decoder_forward.1} parent=5 // pred_fallthru
        _
      %p1974 = scmp.le.s32.totalorder 2, %s16
      // Predicated region
      $region99: #{decoder_forward.1} parent=5 // pred_check
        %p1975 = pneg %p1974
      $region100: #{decoder_forward.1} parent=5 // pred_check_branch
        %1977 = sbr.rel (%p1975) target = $region102
      $region101: #{decoder_forward.1} parent=5 // pred_region
        %s1978 = ssub.s32 %s16, 2
        // Predicated region
        $region103: #{decoder_forward.1} parent=101 // pred_check
          %p1979 = pneg %p239
        $region104: #{decoder_forward.1} parent=101 // pred_check_branch
          %1981 = sbr.rel (%p1979) target = $region106
        $region105: #{decoder_forward.1} parent=101 // pred_region
          %s1982 = smul.u32 2, %s22
          %p1983 = scmp.lt.s32.totalorder %s1982, 3
          %s1984 = scalar_select %p1983, %s1982, 3
          %s1985 = scalar_lea.vmem %s9, %s1984
        $region106: #{decoder_forward.1} parent=101 // pred_fallthru
          _
      $region102: #{decoder_forward.1} parent=5 // pred_fallthru
        _
    $region6: #{decoder_forward.1} parent=1 // loop_footer
      %s20 = sadd.s32 1, %s16
    $region7: #{decoder_forward.1} parent=1 // loop_footer_branch
      %15 = sbr.rel target = $region3
    $region8: #{decoder_forward.1} parent=1 // loop_exit
      _

</llo_original>
